<compile_context>
chip_gen: v7x
topology: tpu7x:2x2x1
jax: 0.10.0
libtpu: 0.0.40
codegen_flags: <defaults>
</compile_context>

<pallas_src>
import functools

import jax
import jax.numpy as jnp
from jax.experimental import pallas as pl
from jax.experimental.pallas import tpu as pltpu


def _round_up(x, m):
    return (x + m - 1) // m * m


def _elu(z):
    return jnp.where(z > 0, z, jnp.exp(z) - 1.0)


def _leaky_relu(z, slope):
    return jnp.where(z > 0, z, slope * z)


def _mm(a, b):
    """[M,K] @ [K,N] -> [M,N] on the MXU with f32 accumulation."""
    return jax.lax.dot_general(a, b, (((1,), (0,)), ((), ())),
                               preferred_element_type=jnp.float32)


def _mm_t(a, b):
    """[M,K] @ [N,K]^T -> [M,N] (rhs-transposed, no explicit transpose)."""
    return jax.lax.dot_general(a, b, (((1,), (1,)), ((), ())),
                               preferred_element_type=jnp.float32)


# ----------------------------------------------------------------------------
# Fused kernel: phase 0 = GAT1 (8 heads) over edge tiles, phase 1 = GAT2 + MLP
# ----------------------------------------------------------------------------
def _dscom_kernel(x_ref, src_ref, dst_ref,
                  w1_ref, a1_ref, bexp_ref,
                  w2_ref, a2_ref, mlpw_ref, mlpb_ref,
                  out_ref, alpha_ref,
                  h1_ref, e1_ref, acc1_ref, h2_ref, e2_ref, acc2_ref,
                  *, slope, fo2):
    f32, bf16 = jnp.float32, jnp.bfloat16

    phase = pl.program_id(0)            # 0: GAT layer 1, 1: GAT layer 2 + MLP
    et = pl.program_id(1)               # edge-tile index
    n_et = pl.num_programs(1)

    n_pad = x_ref.shape[0]
    te = src_ref.shape[1]
    hfo = w1_ref.shape[0]               # heads * per-head features
    h = a1_ref.shape[0] // 2            # number of heads (layer 1)

    # Per-tile scatter/gather masks built in VMEM from the edge endpoints
    # (TE on lanes).  Padded edges use a sentinel index >= n_pad, so their
    # columns are all-zero; padded node rows never match a real endpoint.
    node_iota = jax.lax.broadcasted_iota(jnp.int32, (n_pad, te), 0)
    st = (node_iota == src_ref[...]).astype(bf16)          # [N_pad, TE]
    dt = (node_iota == dst_ref[...]).astype(bf16)          # [N_pad, TE]

    # ------------------- phase 0: GAT layer 1 (all heads fused) ------------
    @pl.when(phase == 0)
    def _layer1():
        @pl.when(et == 0)
        def _init1():
            # h1 = x @ W1^T for all heads at once, feature-major [HFo, N_pad].
            h1 = _mm_t(w1_ref[...], x_ref[...])
            # Append H rows of ones so the single scatter matmul below also
            # produces the per-head rowsum.
            h1_ref[...] = jnp.concatenate(
                [h1, jnp.ones((h, n_pad), f32)], axis=0).astype(bf16)
            # Per-node attention scalars (a_src.h | a_dst.h) for all heads.
            e1_ref[...] = _mm(a1_ref[...], h1.astype(bf16))         # [2H, N]
            acc1_ref[...] = jnp.zeros_like(acc1_ref)

        e1 = e1_ref[...]                                            # [2H, N]
        score = (_mm(e1[0:h, :].astype(bf16), st)
                 + _mm(e1[h:2 * h, :].astype(bf16), dt))            # [H, TE]
        alpha = jnp.clip(jnp.exp(-_leaky_relu(score, slope)), -5.0, 5.0)
        alpha_ref[...] = alpha                                      # lane-dense

        h1d = _mm(h1_ref[...], dt)                     # [HFo+H, TE]  h[dst_e]
        af = _mm(bexp_ref[...], alpha.astype(bf16))    # [HFo+H, TE]  per-row a
        acc1_ref[...] += _mm_t((af * h1d).astype(bf16), st)    # hp1 | rowsum1

    # ------------------- phase 1: GAT layer 2 + final MLP -------------------
    @pl.when(phase == 1)
    def _layer2():
        @pl.when(et == 0)
        def _init2():
            hp1 = acc1_ref[0:hfo, :]                                # [HFo, N]
            rs1 = acc1_ref[hfo:hfo + h, :]                          # [H, N]
            rs1 = jnp.where(rs1 > 0, rs1, 1e-8)
            inv1 = pl.reciprocal(rs1, approx=True)
            inv_full = _mm(bexp_ref[0:hfo, :], inv1.astype(bf16))   # [HFo, N]
            # inner ELU (singleGATLayer, concat=True) + outer ELU (DSCom);
            # dropout is eval-mode identity.
            x1 = _elu(_elu(hp1 * inv_full)).astype(bf16)

            h2 = _mm(w2_ref[...], x1)                               # [Fo2p, N]
            # Row `fo2` is set to ones so the scatter also emits rowsum2.
            row_iota = jax.lax.broadcasted_iota(jnp.int32, h2.shape, 0)
            h2_ref[...] = jnp.where(row_iota == fo2, 1.0, h2).astype(bf16)
            e2_ref[...] = _mm(a2_ref[...], h2.astype(bf16))         # [8, N]
            acc2_ref[...] = jnp.zeros_like(acc2_ref)

        e2 = e2_ref[...]
        score2 = (_mm(e2[0:1, :].astype(bf16), st)
                  + _mm(e2[1:2, :].astype(bf16), dt))               # [1, TE]
        alpha2 = jnp.clip(jnp.exp(-_leaky_relu(score2, slope)), -5.0, 5.0)

        h2d = _mm(h2_ref[...], dt)                                  # [Fo2p, TE]
        acc2_ref[...] += _mm_t((alpha2 * h2d).astype(bf16), st)  # hp2 | rowsum2

        @pl.when(et == n_et - 1)
        def _finalize():
            rs2 = acc2_ref[fo2:fo2 + 1, :]                          # [1, N]
            rs2 = jnp.where(rs2 > 0, rs2, 1e-8)
            inv2 = pl.reciprocal(rs2, approx=True)
            x2 = _elu(_elu(acc2_ref[...] * inv2)).astype(bf16)      # [Fo2p, N]
            y = _mm(mlpw_ref[...], x2) + mlpb_ref[...]              # [outp, N]
            out_ref[...] = _elu(y)


def _pick_edge_tile(n_pad, e_pad, acc_rows):
    # Keep the per-step working set (two [N_pad, TE] bf16 masks plus a few
    # [HFo+H, TE] f32 temporaries, double-buffered edge tiles) near ~12 MiB
    # so it fits the scoped-VMEM defaults of every generation and stays well
    # under v7x's 64 MiB physical VMEM.
    budget = 12 * 1024 * 1024
    per_col = 2 * n_pad * 2 + 6 * acc_rows * 4 + 64
    te = budget // max(per_col, 1)
    te = max(128, min(2048, (te // 128) * 128, e_pad))
    return te


# ----------------------------------------------------------------------------
# DSCom forward: one-off param packing + a single 2-phase pallas_call
# ----------------------------------------------------------------------------
def dscom_forward(params, x, edge_index, *, slope=0.2):
    f32, bf16 = jnp.float32, jnp.bfloat16
    n_nodes, f_in = x.shape
    n_edges = edge_index.shape[0]

    w1 = params["W1"].astype(f32)        # [H, Fo1, Fin]
    a1 = params["a1"].astype(f32)        # [H, 1, 2*Fo1]
    w2 = params["W2"].astype(f32)        # [1, Fo2, H*Fo1]
    a2 = params["a2"].astype(f32)        # [1, 1, 2*Fo2]
    mlp_w = params["mlp_w"].astype(f32)  # [num_out, Fo2]
    mlp_b = params["mlp_b"].astype(f32)  # [num_out]

    h1, fo1, _ = w1.shape
    hfo = h1 * fo1
    fo2 = w2.shape[1]
    num_out = mlp_w.shape[0]

    # Padded sizes: nodes & edges lane-dense, feature dims sublane-dense.
    n_pad = _round_up(max(n_nodes, 1), 128)
    e_pad0 = _round_up(max(n_edges, 1), 128)
    te = _pick_edge_tile(n_pad, e_pad0, hfo + h1)
    e_pad = _round_up(e_pad0, te)
    n_et = e_pad // te
    fo2_pad = _round_up(fo2 + 1, 8)          # +1 "ones" row -> fused rowsum2
    nout_pad = _round_up(max(num_out, 1), 8)

    # Node features, zero-padded, bf16 (used only as an MXU operand).
    x_p = jnp.zeros((n_pad, f_in), bf16).at[:n_nodes, :].set(x.astype(bf16))

    # Edge endpoints padded with sentinel == n_pad (never matches a node row).
    src = edge_index[:, 0].astype(jnp.int32)
    dst = edge_index[:, 1].astype(jnp.int32)
    pad = jnp.full((e_pad - n_edges,), n_pad, jnp.int32)
    src_p = jnp.concatenate([src, pad]).reshape(1, e_pad)
    dst_p = jnp.concatenate([dst, pad]).reshape(1, e_pad)

    # Head-fused parameter packing (tiny, one-off XLA ops outside the kernel).
    w1_all = w1.reshape(hfo, f_in).astype(bf16)                    # [HFo, Fin]
    a_src = a1[:, 0, :fo1]
    a_dst = a1[:, 0, fo1:]
    eye_h = jnp.eye(h1, dtype=f32)
    a1s = (eye_h[:, :, None] * a_src[None, :, :]).reshape(h1, hfo)
    a1d = (eye_h[:, :, None] * a_dst[None, :, :]).reshape(h1, hfo)
    a1_all = jnp.concatenate([a1s, a1d], axis=0).astype(bf16)      # [2H, HFo]
    # [HFo+H, H]: per-feature head expansion stacked on per-head identity.
    bexp = jnp.concatenate([jnp.repeat(eye_h, fo1, axis=0), eye_h],
                           axis=0).astype(bf16)

    w2_p = jnp.zeros((fo2_pad, hfo), f32).at[:fo2, :].set(w2[0]).astype(bf16)
    a2_p = jnp.zeros((8, fo2_pad), f32)
    a2_p = a2_p.at[0, :fo2].set(a2[0, 0, :fo2])
    a2_p = a2_p.at[1, :fo2].set(a2[0, 0, fo2:]).astype(bf16)
    mlpw_p = jnp.zeros((nout_pad, fo2_pad), f32).at[:num_out, :fo2].set(mlp_w)
    mlpw_p = mlpw_p.astype(bf16)
    mlpb_p = jnp.zeros((nout_pad, 1), f32).at[:num_out, 0].set(mlp_b)

    grid = (2, n_et)
    const = lambda p, e: (0, 0)
    etile = lambda p, e: (0, e)
    # During phase 1 the alpha output "parks" on its last block (already fully
    # written during phase 0) so it stays resident and never gets clobbered.
    alpha_map = lambda p, e: (0, (1 - p) * e + p * (n_et - 1))

    in_specs = [
        pl.BlockSpec((n_pad, f_in), const),        # x (resident)
        pl.BlockSpec((1, te), etile),              # src tile
        pl.BlockSpec((1, te), etile),              # dst tile
        pl.BlockSpec((hfo, f_in), const),          # W1 (all heads)
        pl.BlockSpec((2 * h1, hfo), const),        # a_src|a_dst block-diagonal
        pl.BlockSpec((hfo + h1, h1), const),       # head-expansion matrix
        pl.BlockSpec((fo2_pad, hfo), const),       # W2 (padded)
        pl.BlockSpec((8, fo2_pad), const),         # a2 (padded)
        pl.BlockSpec((nout_pad, fo2_pad), const),  # mlp weight (padded)
        pl.BlockSpec((nout_pad, 1), const),        # mlp bias
    ]
    out_specs = [
        pl.BlockSpec((nout_pad, n_pad), const),    # output, feature-major
        pl.BlockSpec((h1, te), alpha_map),         # attention coefficients
    ]
    out_shape = (
        jax.ShapeDtypeStruct((nout_pad, n_pad), f32),
        jax.ShapeDtypeStruct((h1, e_pad), f32),
    )
    scratch = [
        pltpu.VMEM((hfo + h1, n_pad), bf16),   # h1 (+ ones rows)
        pltpu.VMEM((2 * h1, n_pad), f32),      # per-node layer-1 scores
        pltpu.VMEM((hfo + h1, n_pad), f32),    # hp1 | rowsum1 accumulator
        pltpu.VMEM((fo2_pad, n_pad), bf16),    # h2 (+ ones row)
        pltpu.VMEM((8, n_pad), f32),           # per-node layer-2 scores
        pltpu.VMEM((fo2_pad, n_pad), f32),     # hp2 | rowsum2 accumulator
    ]

    # VMEM / cost hints (tiles were sized for a ~12 MiB working set, so this
    # stays comfortably under v7x's 64 MiB physical VMEM).
    mask_bytes = 2 * n_pad * te * 2
    tmp_bytes = 6 * (hfo + h1) * te * 4
    scratch_bytes = ((hfo + h1) * n_pad * 2 + (2 * h1 + hfo + h1) * n_pad * 4
                     + fo2_pad * n_pad * 2 + (8 + fo2_pad) * n_pad * 4)
    io_bytes = (n_pad * f_in * 2 + 4 * te * 4 * 2 + 2 * h1 * te * 4
                + nout_pad * n_pad * 4 + 64 * 1024)
    vmem_limit = int(min(max(2 * (mask_bytes + tmp_bytes) + scratch_bytes
                             + io_bytes, 32 * 1024 * 1024), 48 * 1024 * 1024))

    flops = (2 * e_pad * n_pad * (2 * h1 + 2 * (hfo + h1) + 2 + 2 * fo2_pad)
             + 2 * n_pad * (hfo * f_in + 2 * h1 * hfo + (hfo + h1) * h1
                            + fo2_pad * hfo + 8 * fo2_pad + nout_pad * fo2_pad))
    transcendentals = e_pad * (h1 + 1) + n_pad * (2 * hfo + 2 * fo2_pad + h1 + 1)
    bytes_accessed = (x_p.size * 2 + (src_p.size + dst_p.size) * 4
                      + (w1_all.size + a1_all.size + bexp.size + w2_p.size
                         + a2_p.size + mlpw_p.size) * 2 + mlpb_p.size * 4
                      + (nout_pad * n_pad + h1 * e_pad) * 4)

    out_p, alpha_p = pl.pallas_call(
        functools.partial(_dscom_kernel, slope=slope, fo2=fo2),
        out_shape=out_shape,
        grid_spec=pltpu.PrefetchScalarGridSpec(
            num_scalar_prefetch=0,
            grid=grid,
            in_specs=in_specs,
            out_specs=out_specs,
            scratch_shapes=scratch),
        compiler_params=pltpu.CompilerParams(
            dimension_semantics=("arbitrary", "arbitrary"),
            vmem_limit_bytes=vmem_limit),
        cost_estimate=pl.CostEstimate(
            flops=int(flops), transcendentals=int(transcendentals),
            bytes_accessed=int(bytes_accessed)),
    )(x_p, src_p, dst_p, w1_all, a1_all, bexp, w2_p, a2_p, mlpw_p, mlpb_p)

    out = out_p[:num_out, :n_nodes].T              # back to [N, num_out]
    alpha = alpha_p[:, :n_edges]                   # [H, E]
    # Match PyTorch return: (output, (new_edge [2, E], alpha [H, E]))
    return out, (edge_index.T, alpha)


# ----------------------------------------------------------------------------
# Deterministic parameter init + example run
# ----------------------------------------------------------------------------
def _xavier(key, shape, fan_in, fan_out, gain):
    bound = gain * (6.0 / (fan_in + fan_out)) ** 0.5
    return jax.random.uniform(key, shape, jnp.float32, -bound, bound)


if __name__ == "__main__":
    key = jax.random.PRNGKey(0)
    N, F_in, E, num_out = 16, 16, 40, 4      # small synthetic graph
    k = jax.random.split(key, 10)

    x = jax.random.normal(k[0], (N, F_in), jnp.float32)
    src = jax.random.randint(k[1], (E,), 0, N)
    dst = jax.random.randint(k[2], (E,), 0, N)
    edge_index = jnp.stack([src, dst], axis=1)          # [E, 2], like PyTorch

    gain = 1.414
    # gat1: in_head=8 heads, hidden1=8
    H1, Fo1 = 8, 8
    W1 = _xavier(k[3], (H1, Fo1, F_in), F_in, Fo1, gain)
    a1 = _xavier(k[4], (H1, 1, 2 * Fo1), 1, 2 * Fo1, gain)
    # gat2: out_head=1 head, hidden2=4, input dim = hidden1 * in_head = 64
    H2, Fo2, Fin2 = 1, 4, H1 * Fo1
    W2 = _xavier(k[5], (H2, Fo2, Fin2), Fin2, Fo2, gain)
    a2 = _xavier(k[6], (H2, 1, 2 * Fo2), 1, 2 * Fo2, gain)
    # mlp: Linear(hidden2*out_head=4, num_out)
    bm = (1.0 / Fo2) ** 0.5
    mlp_w = jax.random.uniform(k[7], (num_out, Fo2), jnp.float32, -bm, bm)
    mlp_b = jax.random.uniform(k[8], (num_out,), jnp.float32, -bm, bm)

    params = dict(W1=W1, a1=a1, W2=W2, a2=a2, mlp_w=mlp_w, mlp_b=mlp_b)

    out, (new_edge, alpha) = jax.jit(dscom_forward)(params, x, edge_index)
    jax.block_until_ready(out)
    jax.block_until_ready(alpha)
    jax.block_until_ready(new_edge)

    assert out.shape == (N, num_out)
    assert new_edge.shape == (2, E)
    assert alpha.shape == (H1, E)
    assert bool(jnp.all(jnp.isfinite(out)))
    assert bool(jnp.all(jnp.isfinite(alpha)))
    print("KERNEL_OK")
</pallas_src>

<mosaic_0001>
module attributes {stable_mosaic.version = 11 : i64} {
  func.func @_dscom_kernel(%arg0: i32, %arg1: i32, %arg2: memref<128x16xbf16, #tpu.memory_space<vmem>>, %arg3: memref<1x128xi32, #tpu.memory_space<vmem>>, %arg4: memref<1x128xi32, #tpu.memory_space<vmem>>, %arg5: memref<64x16xbf16, #tpu.memory_space<vmem>>, %arg6: memref<16x64xbf16, #tpu.memory_space<vmem>>, %arg7: memref<72x8xbf16, #tpu.memory_space<vmem>>, %arg8: memref<8x64xbf16, #tpu.memory_space<vmem>>, %arg9: memref<8x8xbf16, #tpu.memory_space<vmem>>, %arg10: memref<8x8xbf16, #tpu.memory_space<vmem>>, %arg11: memref<8x1xf32, #tpu.memory_space<vmem>>, %arg12: memref<8x128xf32, #tpu.memory_space<vmem>>, %arg13: memref<8x128xf32, #tpu.memory_space<vmem>>, %arg14: memref<72x128xbf16, #tpu.memory_space<vmem>>, %arg15: memref<16x128xf32, #tpu.memory_space<vmem>>, %arg16: memref<72x128xf32, #tpu.memory_space<vmem>>, %arg17: memref<8x128xbf16, #tpu.memory_space<vmem>>, %arg18: memref<8x128xf32, #tpu.memory_space<vmem>>, %arg19: memref<8x128xf32, #tpu.memory_space<vmem>>) attributes {dimension_semantics = [#tpu.dimension_semantics<arbitrary>, #tpu.dimension_semantics<arbitrary>], iteration_bounds = array<i64: 2, 1>, scalar_prefetch = 0 : i64, scratch_operands = 6 : i64, tpu.core_type = #tpu.core_type<tc>, window_params = [{pipeline_mode = #tpu.pipeline_mode<synchronous>, transform_indices = @transform_0, window_bounds = array<i64: 128, 16>}, {transform_indices = @transform_1, window_bounds = array<i64: 1, 128>}, {transform_indices = @transform_2, window_bounds = array<i64: 1, 128>}, {pipeline_mode = #tpu.pipeline_mode<synchronous>, transform_indices = @transform_3, window_bounds = array<i64: 64, 16>}, {pipeline_mode = #tpu.pipeline_mode<synchronous>, transform_indices = @transform_4, window_bounds = array<i64: 16, 64>}, {pipeline_mode = #tpu.pipeline_mode<synchronous>, transform_indices = @transform_5, window_bounds = array<i64: 72, 8>}, {pipeline_mode = #tpu.pipeline_mode<synchronous>, transform_indices = @transform_6, window_bounds = array<i64: 8, 64>}, {pipeline_mode = #tpu.pipeline_mode<synchronous>, transform_indices = @transform_7, window_bounds = array<i64: 8, 8>}, {pipeline_mode = #tpu.pipeline_mode<synchronous>, transform_indices = @transform_8, window_bounds = array<i64: 8, 8>}, {pipeline_mode = #tpu.pipeline_mode<synchronous>, transform_indices = @transform_9, window_bounds = array<i64: 8, 1>}, {pipeline_mode = #tpu.pipeline_mode<synchronous>, transform_indices = @transform_10, window_bounds = array<i64: 8, 128>}, {transform_indices = @transform_11, window_bounds = array<i64: 8, 128>}]} {
    %0 = tpu.iota {dimensions = array<i32: 0>} : vector<128x128xi32>
    %c0 = arith.constant 0 : index
    %c0_0 = arith.constant 0 : index
    %1 = vector.load %arg3[%c0, %c0_0] : memref<1x128xi32, #tpu.memory_space<vmem>>, vector<1x128xi32>
    %2 = vector.broadcast %1 : vector<1x128xi32> to vector<128x128xi32>
    %3 = arith.cmpi eq, %0, %2 : vector<128x128xi32>
    %4 = arith.extui %3 : vector<128x128xi1> to vector<128x128xi32>
    %5 = arith.sitofp %4 : vector<128x128xi32> to vector<128x128xf32>
    %6 = arith.truncf %5 : vector<128x128xf32> to vector<128x128xbf16>
    %c0_1 = arith.constant 0 : index
    %c0_2 = arith.constant 0 : index
    %7 = vector.load %arg4[%c0_1, %c0_2] : memref<1x128xi32, #tpu.memory_space<vmem>>, vector<1x128xi32>
    %8 = vector.broadcast %7 : vector<1x128xi32> to vector<128x128xi32>
    %9 = arith.cmpi eq, %0, %8 : vector<128x128xi32>
    %10 = arith.extui %9 : vector<128x128xi1> to vector<128x128xi32>
    %11 = arith.sitofp %10 : vector<128x128xi32> to vector<128x128xf32>
    %12 = arith.truncf %11 : vector<128x128xf32> to vector<128x128xbf16>
    %c0_i32 = arith.constant 0 : i32
    %13 = arith.cmpi eq, %arg0, %c0_i32 : i32
    %14 = arith.extui %13 : i1 to i32
    %c0_i32_3 = arith.constant 0 : i32
    %15 = arith.cmpi ne, %14, %c0_i32_3 : i32
    scf.if %15 {
      %c0_i32_5 = arith.constant 0 : i32
      %19 = arith.cmpi eq, %arg1, %c0_i32_5 : i32
      %20 = arith.extui %19 : i1 to i32
      %c0_i32_6 = arith.constant 0 : i32
      %21 = arith.cmpi ne, %20, %c0_i32_6 : i32
      scf.if %21 {
        %c0_28 = arith.constant 0 : index
        %c0_29 = arith.constant 0 : index
        %54 = vector.load %arg5[%c0_28, %c0_29] : memref<64x16xbf16, #tpu.memory_space<vmem>>, vector<64x16xbf16>
        %c0_30 = arith.constant 0 : index
        %c0_31 = arith.constant 0 : index
        %55 = vector.load %arg2[%c0_30, %c0_31] : memref<128x16xbf16, #tpu.memory_space<vmem>>, vector<128x16xbf16>
        %cst_32 = arith.constant dense<0.000000e+00> : vector<64x128xf32>
        %56 = tpu.matmul %54, %55, %cst_32 {dimension_numbers = #tpu.dot_dimension_numbers<[1], [1], [0], [0], [0, 0, 1, 0], [], []>} : vector<64x16xbf16>, vector<128x16xbf16>, vector<64x128xf32> -> vector<64x128xf32>
        %cst_33 = arith.constant 1.000000e+00 : f32
        %57 = vector.broadcast %cst_33 : f32 to vector<8x128xf32>
        %58 = tpu.concatenate %56, %57 in 0 : vector<64x128xf32>, vector<8x128xf32> -> vector<72x128xf32>
        %59 = arith.truncf %58 : vector<72x128xf32> to vector<72x128xbf16>
        %c0_34 = arith.constant 0 : index
        %c0_35 = arith.constant 0 : index
        %60 = vector.load %arg14[%c0_34, %c0_35] : memref<72x128xbf16, #tpu.memory_space<vmem>>, vector<72x128xbf16>
        tpu.vector_store %arg14[%c0_34, %c0_35], %59 {strides = array<i32>} : memref<72x128xbf16, #tpu.memory_space<vmem>>, vector<72x128xbf16>,
        %c0_36 = arith.constant 0 : index
        %c0_37 = arith.constant 0 : index
        %61 = vector.load %arg6[%c0_36, %c0_37] : memref<16x64xbf16, #tpu.memory_space<vmem>>, vector<16x64xbf16>
        %62 = arith.truncf %56 : vector<64x128xf32> to vector<64x128xbf16>
        %cst_38 = arith.constant dense<0.000000e+00> : vector<16x128xf32>
        %63 = tpu.matmul %61, %62, %cst_38 {dimension_numbers = #tpu.dot_dimension_numbers<[1], [0], [0], [1], [0, 0, 1, 1], [], []>} : vector<16x64xbf16>, vector<64x128xbf16>, vector<16x128xf32> -> vector<16x128xf32>
        %c0_39 = arith.constant 0 : index
        %c0_40 = arith.constant 0 : index
        %64 = vector.load %arg15[%c0_39, %c0_40] : memref<16x128xf32, #tpu.memory_space<vmem>>, vector<16x128xf32>
        tpu.vector_store %arg15[%c0_39, %c0_40], %63 {strides = array<i32>} : memref<16x128xf32, #tpu.memory_space<vmem>>, vector<16x128xf32>,
        %cst_41 = arith.constant 0.000000e+00 : f32
        %65 = vector.broadcast %cst_41 : f32 to vector<72x128xf32>
        %c0_42 = arith.constant 0 : index
        %c0_43 = arith.constant 0 : index
        %66 = vector.load %arg16[%c0_42, %c0_43] : memref<72x128xf32, #tpu.memory_space<vmem>>, vector<72x128xf32>
        tpu.vector_store %arg16[%c0_42, %c0_43], %65 {strides = array<i32>} : memref<72x128xf32, #tpu.memory_space<vmem>>, vector<72x128xf32>,
      } else {
      }
      %c0_7 = arith.constant 0 : index
      %c0_8 = arith.constant 0 : index
      %22 = vector.load %arg15[%c0_7, %c0_8] : memref<16x128xf32, #tpu.memory_space<vmem>>, vector<16x128xf32>
      %23 = vector.extract_strided_slice %22 {offsets = [0, 0], sizes = [8, 128], strides = [1, 1]} : vector<16x128xf32> to vector<8x128xf32>
      %24 = arith.truncf %23 : vector<8x128xf32> to vector<8x128xbf16>
      %cst = arith.constant dense<0.000000e+00> : vector<8x128xf32>
      %25 = tpu.matmul %24, %6, %cst {dimension_numbers = #tpu.dot_dimension_numbers<[1], [0], [0], [1], [0, 0, 1, 1], [], []>} : vector<8x128xbf16>, vector<128x128xbf16>, vector<8x128xf32> -> vector<8x128xf32>
      %26 = vector.extract_strided_slice %22 {offsets = [8, 0], sizes = [8, 128], strides = [1, 1]} : vector<16x128xf32> to vector<8x128xf32>
      %27 = arith.truncf %26 : vector<8x128xf32> to vector<8x128xbf16>
      %cst_9 = arith.constant dense<0.000000e+00> : vector<8x128xf32>
      %28 = tpu.matmul %27, %12, %cst_9 {dimension_numbers = #tpu.dot_dimension_numbers<[1], [0], [0], [1], [0, 0, 1, 1], [], []>} : vector<8x128xbf16>, vector<128x128xbf16>, vector<8x128xf32> -> vector<8x128xf32>
      %29 = arith.addf %25, %28 : vector<8x128xf32>
      %cst_10 = arith.constant 0.000000e+00 : f32
      %30 = vector.broadcast %cst_10 : f32 to vector<8x128xf32>
      %31 = arith.cmpf ogt, %29, %30 : vector<8x128xf32>
      %cst_11 = arith.constant 2.000000e-01 : f32
      %32 = vector.broadcast %cst_11 : f32 to vector<8x128xf32>
      %33 = arith.mulf %32, %29 : vector<8x128xf32>
      %34 = arith.select %31, %29, %33 : vector<8x128xi1>, vector<8x128xf32>
      %cst_12 = arith.constant 0.000000e+00 : f32
      %35 = vector.broadcast %cst_12 : f32 to vector<8x128xf32>
      %36 = arith.subf %35, %34 : vector<8x128xf32>
      %37 = math.exp %36 : vector<8x128xf32>
      %cst_13 = arith.constant -5.000000e+00 : f32
      %cst_14 = arith.constant 5.000000e+00 : f32
      %38 = vector.broadcast %cst_13 : f32 to vector<8x128xf32>
      %39 = arith.maximumf %38, %37 : vector<8x128xf32>
      %40 = vector.broadcast %cst_14 : f32 to vector<8x128xf32>
      %41 = arith.minimumf %40, %39 : vector<8x128xf32>
      %c0_15 = arith.constant 0 : index
      %c0_16 = arith.constant 0 : index
      %42 = vector.load %arg13[%c0_15, %c0_16] : memref<8x128xf32, #tpu.memory_space<vmem>>, vector<8x128xf32>
      tpu.vector_store %arg13[%c0_15, %c0_16], %41 {strides = array<i32>} : memref<8x128xf32, #tpu.memory_space<vmem>>, vector<8x128xf32>,
      %c0_17 = arith.constant 0 : index
      %c0_18 = arith.constant 0 : index
      %43 = vector.load %arg14[%c0_17, %c0_18] : memref<72x128xbf16, #tpu.memory_space<vmem>>, vector<72x128xbf16>
      %cst_19 = arith.constant dense<0.000000e+00> : vector<72x128xf32>
      %44 = tpu.matmul %43, %12, %cst_19 {dimension_numbers = #tpu.dot_dimension_numbers<[1], [0], [0], [1], [0, 0, 1, 1], [], []>} : vector<72x128xbf16>, vector<128x128xbf16>, vector<72x128xf32> -> vector<72x128xf32>
      %c0_20 = arith.constant 0 : index
      %c0_21 = arith.constant 0 : index
      %45 = vector.load %arg7[%c0_20, %c0_21] : memref<72x8xbf16, #tpu.memory_space<vmem>>, vector<72x8xbf16>
      %46 = arith.truncf %41 : vector<8x128xf32> to vector<8x128xbf16>
      %cst_22 = arith.constant dense<0.000000e+00> : vector<72x128xf32>
      %47 = tpu.matmul %45, %46, %cst_22 {dimension_numbers = #tpu.dot_dimension_numbers<[1], [0], [0], [1], [0, 0, 1, 1], [], []>} : vector<72x8xbf16>, vector<8x128xbf16>, vector<72x128xf32> -> vector<72x128xf32>
      %c0_23 = arith.constant 0 : index
      %c0_24 = arith.constant 0 : index
      %48 = vector.load %arg16[%c0_23, %c0_24] : memref<72x128xf32, #tpu.memory_space<vmem>>, vector<72x128xf32>
      %49 = arith.mulf %47, %44 : vector<72x128xf32>
      %50 = arith.truncf %49 : vector<72x128xf32> to vector<72x128xbf16>
      %cst_25 = arith.constant dense<0.000000e+00> : vector<72x128xf32>
      %51 = tpu.matmul %50, %6, %cst_25 {dimension_numbers = #tpu.dot_dimension_numbers<[1], [1], [0], [0], [0, 0, 1, 0], [], []>} : vector<72x128xbf16>, vector<128x128xbf16>, vector<72x128xf32> -> vector<72x128xf32>
      %52 = arith.addf %48, %51 : vector<72x128xf32>
      %c0_26 = arith.constant 0 : index
      %c0_27 = arith.constant 0 : index
      %53 = vector.load %arg16[%c0_26, %c0_27] : memref<72x128xf32, #tpu.memory_space<vmem>>, vector<72x128xf32>
      tpu.vector_store %arg16[%c0_26, %c0_27], %52 {strides = array<i32>} : memref<72x128xf32, #tpu.memory_space<vmem>>, vector<72x128xf32>,
    } else {
    }
    %c1_i32 = arith.constant 1 : i32
    %16 = arith.cmpi eq, %arg0, %c1_i32 : i32
    %17 = arith.extui %16 : i1 to i32
    %c0_i32_4 = arith.constant 0 : i32
    %18 = arith.cmpi ne, %17, %c0_i32_4 : i32
    scf.if %18 {
      %c0_i32_5 = arith.constant 0 : i32
      %19 = arith.cmpi eq, %arg1, %c0_i32_5 : i32
      %20 = arith.extui %19 : i1 to i32
      %c0_i32_6 = arith.constant 0 : i32
      %21 = arith.cmpi ne, %20, %c0_i32_6 : i32
      scf.if %21 {
        %c0_25 = arith.constant 0 : index
        %c0_26 = arith.constant 0 : index
        %54 = vector.load %arg16[%c0_25, %c0_26] : memref<72x128xf32, #tpu.memory_space<vmem>>, vector<64x128xf32>
        %c64 = arith.constant 64 : index
        %c0_27 = arith.constant 0 : index
        %55 = vector.load %arg16[%c64, %c0_27] : memref<72x128xf32, #tpu.memory_space<vmem>>, vector<8x128xf32>
        %cst_28 = arith.constant 0.000000e+00 : f32
        %56 = vector.broadcast %cst_28 : f32 to vector<8x128xf32>
        %57 = arith.cmpf ogt, %55, %56 : vector<8x128xf32>
        %cst_29 = arith.constant 9.99999993E-9 : f32
        %58 = vector.broadcast %cst_29 : f32 to vector<8x128xf32>
        %59 = arith.select %57, %55, %58 : vector<8x128xi1>, vector<8x128xf32>
        %60 = tpu.reciprocal %59 {approx = true} : vector<8x128xf32> -> vector<8x128xf32>
        %c0_30 = arith.constant 0 : index
        %c0_31 = arith.constant 0 : index
        %61 = vector.load %arg7[%c0_30, %c0_31] : memref<72x8xbf16, #tpu.memory_space<vmem>>, vector<64x8xbf16>
        %62 = arith.truncf %60 : vector<8x128xf32> to vector<8x128xbf16>
        %cst_32 = arith.constant dense<0.000000e+00> : vector<64x128xf32>
        %63 = tpu.matmul %61, %62, %cst_32 {dimension_numbers = #tpu.dot_dimension_numbers<[1], [0], [0], [1], [0, 0, 1, 1], [], []>} : vector<64x8xbf16>, vector<8x128xbf16>, vector<64x128xf32> -> vector<64x128xf32>
        %64 = arith.mulf %54, %63 : vector<64x128xf32>
        %cst_33 = arith.constant 0.000000e+00 : f32
        %65 = vector.broadcast %cst_33 : f32 to vector<64x128xf32>
        %66 = arith.cmpf ogt, %64, %65 : vector<64x128xf32>
        %67 = math.exp %64 : vector<64x128xf32>
        %cst_34 = arith.constant 1.000000e+00 : f32
        %68 = vector.broadcast %cst_34 : f32 to vector<64x128xf32>
        %69 = arith.subf %67, %68 : vector<64x128xf32>
        %70 = arith.select %66, %64, %69 : vector<64x128xi1>, vector<64x128xf32>
        %cst_35 = arith.constant 0.000000e+00 : f32
        %71 = vector.broadcast %cst_35 : f32 to vector<64x128xf32>
        %72 = arith.cmpf ogt, %70, %71 : vector<64x128xf32>
        %73 = math.exp %70 : vector<64x128xf32>
        %cst_36 = arith.constant 1.000000e+00 : f32
        %74 = vector.broadcast %cst_36 : f32 to vector<64x128xf32>
        %75 = arith.subf %73, %74 : vector<64x128xf32>
        %76 = arith.select %72, %70, %75 : vector<64x128xi1>, vector<64x128xf32>
        %77 = arith.truncf %76 : vector<64x128xf32> to vector<64x128xbf16>
        %c0_37 = arith.constant 0 : index
        %c0_38 = arith.constant 0 : index
        %78 = vector.load %arg8[%c0_37, %c0_38] : memref<8x64xbf16, #tpu.memory_space<vmem>>, vector<8x64xbf16>
        %cst_39 = arith.constant dense<0.000000e+00> : vector<8x128xf32>
        %79 = tpu.matmul %78, %77, %cst_39 {dimension_numbers = #tpu.dot_dimension_numbers<[1], [0], [0], [1], [0, 0, 1, 1], [], []>} : vector<8x64xbf16>, vector<64x128xbf16>, vector<8x128xf32> -> vector<8x128xf32>
        %80 = tpu.iota {dimensions = array<i32: 0>} : vector<8x128xi32>
        %c4_i32 = arith.constant 4 : i32
        %81 = vector.broadcast %c4_i32 : i32 to vector<8x128xi32>
        %82 = arith.cmpi eq, %80, %81 : vector<8x128xi32>
        %cst_40 = arith.constant 1.000000e+00 : f32
        %83 = vector.broadcast %cst_40 : f32 to vector<8x128xf32>
        %84 = arith.select %82, %83, %79 : vector<8x128xi1>, vector<8x128xf32>
        %85 = arith.truncf %84 : vector<8x128xf32> to vector<8x128xbf16>
        %c0_41 = arith.constant 0 : index
        %c0_42 = arith.constant 0 : index
        %86 = vector.load %arg17[%c0_41, %c0_42] : memref<8x128xbf16, #tpu.memory_space<vmem>>, vector<8x128xbf16>
        tpu.vector_store %arg17[%c0_41, %c0_42], %85 {strides = array<i32>} : memref<8x128xbf16, #tpu.memory_space<vmem>>, vector<8x128xbf16>,
        %c0_43 = arith.constant 0 : index
        %c0_44 = arith.constant 0 : index
        %87 = vector.load %arg9[%c0_43, %c0_44] : memref<8x8xbf16, #tpu.memory_space<vmem>>, vector<8x8xbf16>
        %88 = arith.truncf %79 : vector<8x128xf32> to vector<8x128xbf16>
        %cst_45 = arith.constant dense<0.000000e+00> : vector<8x128xf32>
        %89 = tpu.matmul %87, %88, %cst_45 {dimension_numbers = #tpu.dot_dimension_numbers<[1], [0], [0], [1], [0, 0, 1, 1], [], []>} : vector<8x8xbf16>, vector<8x128xbf16>, vector<8x128xf32> -> vector<8x128xf32>
        %c0_46 = arith.constant 0 : index
        %c0_47 = arith.constant 0 : index
        %90 = vector.load %arg18[%c0_46, %c0_47] : memref<8x128xf32, #tpu.memory_space<vmem>>, vector<8x128xf32>
        tpu.vector_store %arg18[%c0_46, %c0_47], %89 {strides = array<i32>} : memref<8x128xf32, #tpu.memory_space<vmem>>, vector<8x128xf32>,
        %cst_48 = arith.constant 0.000000e+00 : f32
        %91 = vector.broadcast %cst_48 : f32 to vector<8x128xf32>
        %c0_49 = arith.constant 0 : index
        %c0_50 = arith.constant 0 : index
        %92 = vector.load %arg19[%c0_49, %c0_50] : memref<8x128xf32, #tpu.memory_space<vmem>>, vector<8x128xf32>
        tpu.vector_store %arg19[%c0_49, %c0_50], %91 {strides = array<i32>} : memref<8x128xf32, #tpu.memory_space<vmem>>, vector<8x128xf32>,
      } else {
      }
      %c0_7 = arith.constant 0 : index
      %c0_8 = arith.constant 0 : index
      %22 = vector.load %arg18[%c0_7, %c0_8] : memref<8x128xf32, #tpu.memory_space<vmem>>, vector<8x128xf32>
      %23 = vector.extract_strided_slice %22 {offsets = [0, 0], sizes = [1, 128], strides = [1, 1]} : vector<8x128xf32> to vector<1x128xf32>
      %24 = arith.truncf %23 : vector<1x128xf32> to vector<1x128xbf16>
      %cst = arith.constant dense<0.000000e+00> : vector<1x128xf32>
      %25 = tpu.matmul %24, %6, %cst {dimension_numbers = #tpu.dot_dimension_numbers<[1], [0], [0], [1], [0, 0, 1, 1], [], []>} : vector<1x128xbf16>, vector<128x128xbf16>, vector<1x128xf32> -> vector<1x128xf32>
      %26 = vector.extract_strided_slice %22 {offsets = [1, 0], sizes = [1, 128], strides = [1, 1]} : vector<8x128xf32> to vector<1x128xf32>
      %27 = arith.truncf %26 : vector<1x128xf32> to vector<1x128xbf16>
      %cst_9 = arith.constant dense<0.000000e+00> : vector<1x128xf32>
      %28 = tpu.matmul %27, %12, %cst_9 {dimension_numbers = #tpu.dot_dimension_numbers<[1], [0], [0], [1], [0, 0, 1, 1], [], []>} : vector<1x128xbf16>, vector<128x128xbf16>, vector<1x128xf32> -> vector<1x128xf32>
      %29 = arith.addf %25, %28 : vector<1x128xf32>
      %cst_10 = arith.constant 0.000000e+00 : f32
      %30 = vector.broadcast %cst_10 : f32 to vector<1x128xf32>
      %31 = arith.cmpf ogt, %29, %30 : vector<1x128xf32>
      %cst_11 = arith.constant 2.000000e-01 : f32
      %32 = vector.broadcast %cst_11 : f32 to vector<1x128xf32>
      %33 = arith.mulf %32, %29 : vector<1x128xf32>
      %34 = arith.select %31, %29, %33 : vector<1x128xi1>, vector<1x128xf32>
      %cst_12 = arith.constant 0.000000e+00 : f32
      %35 = vector.broadcast %cst_12 : f32 to vector<1x128xf32>
      %36 = arith.subf %35, %34 : vector<1x128xf32>
      %37 = math.exp %36 : vector<1x128xf32>
      %cst_13 = arith.constant -5.000000e+00 : f32
      %cst_14 = arith.constant 5.000000e+00 : f32
      %38 = vector.broadcast %cst_13 : f32 to vector<1x128xf32>
      %39 = arith.maximumf %38, %37 : vector<1x128xf32>
      %40 = vector.broadcast %cst_14 : f32 to vector<1x128xf32>
      %41 = arith.minimumf %40, %39 : vector<1x128xf32>
      %c0_15 = arith.constant 0 : index
      %c0_16 = arith.constant 0 : index
      %42 = vector.load %arg17[%c0_15, %c0_16] : memref<8x128xbf16, #tpu.memory_space<vmem>>, vector<8x128xbf16>
      %cst_17 = arith.constant dense<0.000000e+00> : vector<8x128xf32>
      %43 = tpu.matmul %42, %12, %cst_17 {dimension_numbers = #tpu.dot_dimension_numbers<[1], [0], [0], [1], [0, 0, 1, 1], [], []>} : vector<8x128xbf16>, vector<128x128xbf16>, vector<8x128xf32> -> vector<8x128xf32>
      %c0_18 = arith.constant 0 : index
      %c0_19 = arith.constant 0 : index
      %44 = vector.load %arg19[%c0_18, %c0_19] : memref<8x128xf32, #tpu.memory_space<vmem>>, vector<8x128xf32>
      %45 = vector.broadcast %41 : vector<1x128xf32> to vector<8x128xf32>
      %46 = arith.mulf %45, %43 : vector<8x128xf32>
      %47 = arith.truncf %46 : vector<8x128xf32> to vector<8x128xbf16>
      %cst_20 = arith.constant dense<0.000000e+00> : vector<8x128xf32>
      %48 = tpu.matmul %47, %6, %cst_20 {dimension_numbers = #tpu.dot_dimension_numbers<[1], [1], [0], [0], [0, 0, 1, 0], [], []>} : vector<8x128xbf16>, vector<128x128xbf16>, vector<8x128xf32> -> vector<8x128xf32>
      %49 = arith.addf %44, %48 : vector<8x128xf32>
      %c0_21 = arith.constant 0 : index
      %c0_22 = arith.constant 0 : index
      %50 = vector.load %arg19[%c0_21, %c0_22] : memref<8x128xf32, #tpu.memory_space<vmem>>, vector<8x128xf32>
      tpu.vector_store %arg19[%c0_21, %c0_22], %49 {strides = array<i32>} : memref<8x128xf32, #tpu.memory_space<vmem>>, vector<8x128xf32>,
      %c0_i32_23 = arith.constant 0 : i32
      %51 = arith.cmpi eq, %arg1, %c0_i32_23 : i32
      %52 = arith.extui %51 : i1 to i32
      %c0_i32_24 = arith.constant 0 : i32
      %53 = arith.cmpi ne, %52, %c0_i32_24 : i32
      scf.if %53 {
        %c4 = arith.constant 4 : index
        %c0_25 = arith.constant 0 : index
        %54 = vector.load %arg19[%c4, %c0_25] : memref<8x128xf32, #tpu.memory_space<vmem>>, vector<1x128xf32>
        %cst_26 = arith.constant 0.000000e+00 : f32
        %55 = vector.broadcast %cst_26 : f32 to vector<1x128xf32>
        %56 = arith.cmpf ogt, %54, %55 : vector<1x128xf32>
        %cst_27 = arith.constant 9.99999993E-9 : f32
        %57 = vector.broadcast %cst_27 : f32 to vector<1x128xf32>
        %58 = arith.select %56, %54, %57 : vector<1x128xi1>, vector<1x128xf32>
        %59 = tpu.reciprocal %58 {approx = true} : vector<1x128xf32> -> vector<1x128xf32>
        %c0_28 = arith.constant 0 : index
        %c0_29 = arith.constant 0 : index
        %60 = vector.load %arg19[%c0_28, %c0_29] : memref<8x128xf32, #tpu.memory_space<vmem>>, vector<8x128xf32>
        %61 = vector.broadcast %59 : vector<1x128xf32> to vector<8x128xf32>
        %62 = arith.mulf %60, %61 : vector<8x128xf32>
        %cst_30 = arith.constant 0.000000e+00 : f32
        %63 = vector.broadcast %cst_30 : f32 to vector<8x128xf32>
        %64 = arith.cmpf ogt, %62, %63 : vector<8x128xf32>
        %65 = math.exp %62 : vector<8x128xf32>
        %cst_31 = arith.constant 1.000000e+00 : f32
        %66 = vector.broadcast %cst_31 : f32 to vector<8x128xf32>
        %67 = arith.subf %65, %66 : vector<8x128xf32>
        %68 = arith.select %64, %62, %67 : vector<8x128xi1>, vector<8x128xf32>
        %cst_32 = arith.constant 0.000000e+00 : f32
        %69 = vector.broadcast %cst_32 : f32 to vector<8x128xf32>
        %70 = arith.cmpf ogt, %68, %69 : vector<8x128xf32>
        %71 = math.exp %68 : vector<8x128xf32>
        %cst_33 = arith.constant 1.000000e+00 : f32
        %72 = vector.broadcast %cst_33 : f32 to vector<8x128xf32>
        %73 = arith.subf %71, %72 : vector<8x128xf32>
        %74 = arith.select %70, %68, %73 : vector<8x128xi1>, vector<8x128xf32>
        %75 = arith.truncf %74 : vector<8x128xf32> to vector<8x128xbf16>
        %c0_34 = arith.constant 0 : index
        %c0_35 = arith.constant 0 : index
        %76 = vector.load %arg10[%c0_34, %c0_35] : memref<8x8xbf16, #tpu.memory_space<vmem>>, vector<8x8xbf16>
        %cst_36 = arith.constant dense<0.000000e+00> : vector<8x128xf32>
        %77 = tpu.matmul %76, %75, %cst_36 {dimension_numbers = #tpu.dot_dimension_numbers<[1], [0], [0], [1], [0, 0, 1, 1], [], []>} : vector<8x8xbf16>, vector<8x128xbf16>, vector<8x128xf32> -> vector<8x128xf32>
        %c0_37 = arith.constant 0 : index
        %c0_38 = arith.constant 0 : index
        %78 = vector.load %arg11[%c0_37, %c0_38] : memref<8x1xf32, #tpu.memory_space<vmem>>, vector<8x1xf32>
        %79 = vector.broadcast %78 : vector<8x1xf32> to vector<8x128xf32>
        %80 = arith.addf %77, %79 : vector<8x128xf32>
        %cst_39 = arith.constant 0.000000e+00 : f32
        %81 = vector.broadcast %cst_39 : f32 to vector<8x128xf32>
        %82 = arith.cmpf ogt, %80, %81 : vector<8x128xf32>
        %83 = math.exp %80 : vector<8x128xf32>
        %cst_40 = arith.constant 1.000000e+00 : f32
        %84 = vector.broadcast %cst_40 : f32 to vector<8x128xf32>
        %85 = arith.subf %83, %84 : vector<8x128xf32>
        %86 = arith.select %82, %80, %85 : vector<8x128xi1>, vector<8x128xf32>
        %c0_41 = arith.constant 0 : index
        %c0_42 = arith.constant 0 : index
        %87 = vector.load %arg12[%c0_41, %c0_42] : memref<8x128xf32, #tpu.memory_space<vmem>>, vector<8x128xf32>
        tpu.vector_store %arg12[%c0_41, %c0_42], %86 {strides = array<i32>} : memref<8x128xf32, #tpu.memory_space<vmem>>, vector<8x128xf32>,
      } else {
      }
    } else {
    }
    return
  }
  func.func @transform_0(%arg0: i32, %arg1: i32) -> (i32, i32) {
    %c0_i32 = arith.constant 0 : i32
    %c0_i32_0 = arith.constant 0 : i32
    %c0_i32_1 = arith.constant 0 : i32
    return %c0_i32, %c0_i32_0 : i32, i32
  }
  func.func @transform_1(%arg0: i32, %arg1: i32) -> (i32, i32) {
    %c0_i32 = arith.constant 0 : i32
    %c0_i32_0 = arith.constant 0 : i32
    return %c0_i32, %arg1 : i32, i32
  }
  func.func @transform_2(%arg0: i32, %arg1: i32) -> (i32, i32) {
    %c0_i32 = arith.constant 0 : i32
    %c0_i32_0 = arith.constant 0 : i32
    return %c0_i32, %arg1 : i32, i32
  }
  func.func @transform_3(%arg0: i32, %arg1: i32) -> (i32, i32) {
    %c0_i32 = arith.constant 0 : i32
    %c0_i32_0 = arith.constant 0 : i32
    %c0_i32_1 = arith.constant 0 : i32
    return %c0_i32, %c0_i32_0 : i32, i32
  }
  func.func @transform_4(%arg0: i32, %arg1: i32) -> (i32, i32) {
    %c0_i32 = arith.constant 0 : i32
    %c0_i32_0 = arith.constant 0 : i32
    %c0_i32_1 = arith.constant 0 : i32
    return %c0_i32, %c0_i32_0 : i32, i32
  }
  func.func @transform_5(%arg0: i32, %arg1: i32) -> (i32, i32) {
    %c0_i32 = arith.constant 0 : i32
    %c0_i32_0 = arith.constant 0 : i32
    %c0_i32_1 = arith.constant 0 : i32
    return %c0_i32, %c0_i32_0 : i32, i32
  }
  func.func @transform_6(%arg0: i32, %arg1: i32) -> (i32, i32) {
    %c0_i32 = arith.constant 0 : i32
    %c0_i32_0 = arith.constant 0 : i32
    %c0_i32_1 = arith.constant 0 : i32
    return %c0_i32, %c0_i32_0 : i32, i32
  }
  func.func @transform_7(%arg0: i32, %arg1: i32) -> (i32, i32) {
    %c0_i32 = arith.constant 0 : i32
    %c0_i32_0 = arith.constant 0 : i32
    %c0_i32_1 = arith.constant 0 : i32
    return %c0_i32, %c0_i32_0 : i32, i32
  }
  func.func @transform_8(%arg0: i32, %arg1: i32) -> (i32, i32) {
    %c0_i32 = arith.constant 0 : i32
    %c0_i32_0 = arith.constant 0 : i32
    %c0_i32_1 = arith.constant 0 : i32
    return %c0_i32, %c0_i32_0 : i32, i32
  }
  func.func @transform_9(%arg0: i32, %arg1: i32) -> (i32, i32) {
    %c0_i32 = arith.constant 0 : i32
    %c0_i32_0 = arith.constant 0 : i32
    %c0_i32_1 = arith.constant 0 : i32
    return %c0_i32, %c0_i32_0 : i32, i32
  }
  func.func @transform_10(%arg0: i32, %arg1: i32) -> (i32, i32) {
    %c0_i32 = arith.constant 0 : i32
    %c0_i32_0 = arith.constant 0 : i32
    %c0_i32_1 = arith.constant 0 : i32
    return %c0_i32, %c0_i32_0 : i32, i32
  }
  func.func @transform_11(%arg0: i32, %arg1: i32) -> (i32, i32) {
    %c1_i32 = arith.constant 1 : i32
    %0 = arith.subi %c1_i32, %arg0 : i32
    %1 = arith.muli %0, %arg1 : i32
    %c0_i32 = arith.constant 0 : i32
    %2 = arith.muli %arg0, %c0_i32 : i32
    %3 = arith.addi %1, %2 : i32
    %c0_i32_0 = arith.constant 0 : i32
    %c0_i32_1 = arith.constant 0 : i32
    return %c0_i32_0, %3 : i32, i32
  }
}

</mosaic_0001>

<llo_original>
// kernel: dscom_forward.1
$region0: #{dscom_forward.1}
  #allocation0 [shape = 'u32[]', space=smem, size = 0x4, offset = 0x4, fixed_abs, tag = 'smem constant byte address 0x4 - core index']
  #allocation1 [shape = 'u32[144,128]{1,0:T(1,128)}', space=vmem, size = 0x12000, scoped, tag = 'internal scratch']
  #allocation2 [shape = 'bf16[72,128]{1,0:T(8,128)(2,1)}', space=vmem, size = 0x4800, scoped, tag = 'scratch operand']
  #allocation3 [shape = 'f32[16,128]{1,0:T(8,128)}', space=vmem, size = 0x2000, scoped, tag = 'scratch operand']
  #allocation4 [shape = 'f32[72,128]{1,0:T(8,128)}', space=vmem, size = 0x9000, scoped, tag = 'scratch operand']
  #allocation5 [shape = 'bf16[8,128]{1,0:T(8,128)(2,1)}', space=vmem, size = 0x800, scoped, tag = 'scratch operand']
  #allocation6 [shape = 'f32[8,128]{1,0:T(8,128)}', space=vmem, size = 0x1000, scoped, tag = 'scratch operand']
  #allocation7 [shape = 'f32[8,128]{1,0:T(8,128)}', space=vmem, size = 0x1000, scoped, tag = 'scratch operand']
  %s0 = inlined_call_operand.vmem [shape: bf16[128,16], index: 0, kind: input, shape index: {}]
  %s1 = inlined_call_operand.vmem [shape: s32[1,128], index: 1, kind: input, shape index: {}]
  %s2 = inlined_call_operand.vmem [shape: s32[1,128], index: 2, kind: input, shape index: {}]
  %s3 = inlined_call_operand.vmem [shape: bf16[64,16], index: 3, kind: input, shape index: {}]
  %s4 = inlined_call_operand.vmem [shape: bf16[16,64], index: 4, kind: input, shape index: {}]
  %s5 = inlined_call_operand.vmem [shape: bf16[72,8], index: 5, kind: input, shape index: {}]
  %s6 = inlined_call_operand.vmem [shape: bf16[8,64], index: 6, kind: input, shape index: {}]
  %s7 = inlined_call_operand.vmem [shape: bf16[8,8], index: 7, kind: input, shape index: {}]
  %s8 = inlined_call_operand.vmem [shape: bf16[8,8], index: 8, kind: input, shape index: {}]
  %s9 = inlined_call_operand.vmem [shape: f32[8,1], index: 9, kind: input, shape index: {}]
  %s10 = inlined_call_operand.vmem [shape: f32[8,128], index: 10, kind: output, shape index: {0}]
  %s11 = inlined_call_operand.hbm [shape: f32[8,128], index: 11, kind: output, shape index: {1}]
  %12 = xla_tuple %s10, %s11
  %s13 = sld [smem:[#allocation0]]
  $region101: #{dscom_forward.1} parent=0
    _
  %s15 = ssub.s32 1, %s13
  %s16 = scalar_select 0, %s15, %s13
  $region1: #{dscom_forward.1} parent=0
    #allocation8 [shape = 'u8[8192]{0}', space=vmem, size = 0x2000, scoped, tag = 'output window, operand 1']
    #allocation9 [shape = 's32[2]{0}', space=sflag, size = 0x8, scoped, tag = 'scoped memory for dscom_forward.1']
    %17 = vsyncpa [#allocation9], 0
    %s18 = scalar_lea.sflag [#allocation9], 1
    %19 = vsyncpa %s18, 0
    loop: start=0, step=1, limit=4
    $region2: #{dscom_forward.1} parent=1 // loop_pre_header
      _
    $region3: #{dscom_forward.1} parent=1 // loop_header
      %s21 = sphi 0, %s25
      %p22 = scmp.ge.s32.totalorder %s21, 4
      %s28 = sphi 0, %s40
      %s29 = sphi 0, %s36
      %s30 = sphi 0, %s28
      %s31 = sphi 0, %s29
      %s32 = sphi 0, %s30
      %s33 = sphi 0, %s31
      %s41 = sphi 0, %s41
      %s43 = sphi 0, %s41
      %s44 = sphi 0, %s43
      %s58 = sphi 0, %s44
      %s64 = sphi 0, %s66
      %s67 = sphi 0, %s64
      %s68 = sphi 0, %s67
      %s84 = sphi 0, %s68
      %s90 = sphi 0, %s92
      %s93 = sphi 0, %s90
      %s94 = sphi 0, %s93
      %s110 = sphi 0, %s94
      %s114 = sphi 0, %s114
      %s116 = sphi 0, %s114
      %s117 = sphi 0, %s116
      %s131 = sphi 0, %s117
      %s135 = sphi 0, %s135
      %s137 = sphi 0, %s135
      %s138 = sphi 0, %s137
      %s152 = sphi 0, %s138
      %s156 = sphi 0, %s156
      %s158 = sphi 0, %s156
      %s159 = sphi 0, %s158
      %s173 = sphi 0, %s159
      %s177 = sphi 0, %s177
      %s179 = sphi 0, %s177
      %s180 = sphi 0, %s179
      %s194 = sphi 0, %s180
      %s198 = sphi 0, %s198
      %s200 = sphi 0, %s198
      %s201 = sphi 0, %s200
      %s215 = sphi 0, %s201
      %s219 = sphi 0, %s219
      %s221 = sphi 0, %s219
      %s222 = sphi 0, %s221
      %s236 = sphi 0, %s222
      %s240 = sphi 0, %s240
      %s242 = sphi 0, %s240
      %s243 = sphi 0, %s242
      %s257 = sphi 0, %s243
      %s261 = sphi 0, %s261
      %s263 = sphi 0, %s261
      %s264 = sphi 0, %s263
      %s278 = sphi 0, %s264
      %s288 = sphi 0, %s290
      %s291 = sphi 0, %s288
      %s292 = sphi 0, %s291
      %s308 = sphi 0, %s292
    $region4: #{dscom_forward.1} parent=1 // loop_header_branch
      %24 = sbr.rel (%p22) target = $region8
    $region5: #{dscom_forward.1} parent=1 // loop_body
      %s26 = ssub.s32 %s21, 1
      %s27 = ssub.s32 %s21, 2
      %s34 = sadd.s32 1, %s29
      %p35 = scmp.ge.s32.totalorder %s34, 1
      %s36 = scalar_select %p35, 0, %s34
      %s37 = sadd.s32 1, %s28
      %s38 = scalar_select %p35, %s37, %s28
      %p39 = scmp.ge.s32.totalorder %s38, 2
      %s40 = scalar_select %p39, 0, %s38
      %s42 = sadd.s32 %s41, 1
      %p45 = scmp.eq.s32.totalorder %s21, 1
      %p46 = scmp.ne.s32.totalorder %s41, %s43
      %p47 = scmp.eq.s32.totalorder %s21, 0
      %p48 = por %p46, %p47
      %p49 = scmp.ne.s32.totalorder %s41, %s43
      %p50 = scmp.eq.s32.totalorder %s26, 1
      %p51 = por %p49, %p50
      %p52 = scmp.ne.s32.totalorder %s43, %s44
      %p53 = scmp.eq.s32.totalorder %s26, 0
      %p54 = por %p52, %p53
      %p55 = scmp.ne.s32.totalorder %s43, %s44
      %p56 = scmp.eq.s32.totalorder %s27, 1
      %p57 = por %p55, %p56
      %p59 = scmp.ne.s32.totalorder %s44, %s58
      %p60 = scmp.eq.s32.totalorder %s27, 0
      %p61 = por %p59, %p60
      %s62 = ssub.s32 %s29, %s36
      %p63 = scmp.eq.s32.totalorder %s62, 0
      %s65 = sadd.s32 %s64, 1
      %s66 = scalar_select %p63, %s64, %s65
      %p69 = pneg %p63
      %p70 = scmp.eq.s32.totalorder %s21, 1
      %p71 = por %p69, %p70
      %p72 = scmp.ne.s32.totalorder %s64, %s67
      %p73 = scmp.eq.s32.totalorder %s21, 0
      %p74 = por %p72, %p73
      %p75 = scmp.ne.s32.totalorder %s64, %s67
      %p76 = scmp.eq.s32.totalorder %s26, 1
      %p77 = por %p75, %p76
      %p78 = scmp.ne.s32.totalorder %s67, %s68
      %p79 = scmp.eq.s32.totalorder %s26, 0
      %p80 = por %p78, %p79
      %p81 = scmp.ne.s32.totalorder %s67, %s68
      %p82 = scmp.eq.s32.totalorder %s27, 1
      %p83 = por %p81, %p82
      %p85 = scmp.ne.s32.totalorder %s68, %s84
      %p86 = scmp.eq.s32.totalorder %s27, 0
      %p87 = por %p85, %p86
      %s88 = ssub.s32 %s29, %s36
      %p89 = scmp.eq.s32.totalorder %s88, 0
      %s91 = sadd.s32 %s90, 1
      %s92 = scalar_select %p89, %s90, %s91
      %p95 = pneg %p89
      %p96 = scmp.eq.s32.totalorder %s21, 1
      %p97 = por %p95, %p96
      %p98 = scmp.ne.s32.totalorder %s90, %s93
      %p99 = scmp.eq.s32.totalorder %s21, 0
      %p100 = por %p98, %p99
      %p101 = scmp.ne.s32.totalorder %s90, %s93
      %p102 = scmp.eq.s32.totalorder %s26, 1
      %p103 = por %p101, %p102
      %p104 = scmp.ne.s32.totalorder %s93, %s94
      %p105 = scmp.eq.s32.totalorder %s26, 0
      %p106 = por %p104, %p105
      %p107 = scmp.ne.s32.totalorder %s93, %s94
      %p108 = scmp.eq.s32.totalorder %s27, 1
      %p109 = por %p107, %p108
      %p111 = scmp.ne.s32.totalorder %s94, %s110
      %p112 = scmp.eq.s32.totalorder %s27, 0
      %p113 = por %p111, %p112
      %s115 = sadd.s32 %s114, 1
      %p118 = scmp.eq.s32.totalorder %s21, 1
      %p119 = scmp.ne.s32.totalorder %s114, %s116
      %p120 = scmp.eq.s32.totalorder %s21, 0
      %p121 = por %p119, %p120
      %p122 = scmp.ne.s32.totalorder %s114, %s116
      %p123 = scmp.eq.s32.totalorder %s26, 1
      %p124 = por %p122, %p123
      %p125 = scmp.ne.s32.totalorder %s116, %s117
      %p126 = scmp.eq.s32.totalorder %s26, 0
      %p127 = por %p125, %p126
      %p128 = scmp.ne.s32.totalorder %s116, %s117
      %p129 = scmp.eq.s32.totalorder %s27, 1
      %p130 = por %p128, %p129
      %p132 = scmp.ne.s32.totalorder %s117, %s131
      %p133 = scmp.eq.s32.totalorder %s27, 0
      %p134 = por %p132, %p133
      %s136 = sadd.s32 %s135, 1
      %p139 = scmp.eq.s32.totalorder %s21, 1
      %p140 = scmp.ne.s32.totalorder %s135, %s137
      %p141 = scmp.eq.s32.totalorder %s21, 0
      %p142 = por %p140, %p141
      %p143 = scmp.ne.s32.totalorder %s135, %s137
      %p144 = scmp.eq.s32.totalorder %s26, 1
      %p145 = por %p143, %p144
      %p146 = scmp.ne.s32.totalorder %s137, %s138
      %p147 = scmp.eq.s32.totalorder %s26, 0
      %p148 = por %p146, %p147
      %p149 = scmp.ne.s32.totalorder %s137, %s138
      %p150 = scmp.eq.s32.totalorder %s27, 1
      %p151 = por %p149, %p150
      %p153 = scmp.ne.s32.totalorder %s138, %s152
      %p154 = scmp.eq.s32.totalorder %s27, 0
      %p155 = por %p153, %p154
      %s157 = sadd.s32 %s156, 1
      %p160 = scmp.eq.s32.totalorder %s21, 1
      %p161 = scmp.ne.s32.totalorder %s156, %s158
      %p162 = scmp.eq.s32.totalorder %s21, 0
      %p163 = por %p161, %p162
      %p164 = scmp.ne.s32.totalorder %s156, %s158
      %p165 = scmp.eq.s32.totalorder %s26, 1
      %p166 = por %p164, %p165
      %p167 = scmp.ne.s32.totalorder %s158, %s159
      %p168 = scmp.eq.s32.totalorder %s26, 0
      %p169 = por %p167, %p168
      %p170 = scmp.ne.s32.totalorder %s158, %s159
      %p171 = scmp.eq.s32.totalorder %s27, 1
      %p172 = por %p170, %p171
      %p174 = scmp.ne.s32.totalorder %s159, %s173
      %p175 = scmp.eq.s32.totalorder %s27, 0
      %p176 = por %p174, %p175
      %s178 = sadd.s32 %s177, 1
      %p181 = scmp.eq.s32.totalorder %s21, 1
      %p182 = scmp.ne.s32.totalorder %s177, %s179
      %p183 = scmp.eq.s32.totalorder %s21, 0
      %p184 = por %p182, %p183
      %p185 = scmp.ne.s32.totalorder %s177, %s179
      %p186 = scmp.eq.s32.totalorder %s26, 1
      %p187 = por %p185, %p186
      %p188 = scmp.ne.s32.totalorder %s179, %s180
      %p189 = scmp.eq.s32.totalorder %s26, 0
      %p190 = por %p188, %p189
      %p191 = scmp.ne.s32.totalorder %s179, %s180
      %p192 = scmp.eq.s32.totalorder %s27, 1
      %p193 = por %p191, %p192
      %p195 = scmp.ne.s32.totalorder %s180, %s194
      %p196 = scmp.eq.s32.totalorder %s27, 0
      %p197 = por %p195, %p196
      %s199 = sadd.s32 %s198, 1
      %p202 = scmp.eq.s32.totalorder %s21, 1
      %p203 = scmp.ne.s32.totalorder %s198, %s200
      %p204 = scmp.eq.s32.totalorder %s21, 0
      %p205 = por %p203, %p204
      %p206 = scmp.ne.s32.totalorder %s198, %s200
      %p207 = scmp.eq.s32.totalorder %s26, 1
      %p208 = por %p206, %p207
      %p209 = scmp.ne.s32.totalorder %s200, %s201
      %p210 = scmp.eq.s32.totalorder %s26, 0
      %p211 = por %p209, %p210
      %p212 = scmp.ne.s32.totalorder %s200, %s201
      %p213 = scmp.eq.s32.totalorder %s27, 1
      %p214 = por %p212, %p213
      %p216 = scmp.ne.s32.totalorder %s201, %s215
      %p217 = scmp.eq.s32.totalorder %s27, 0
      %p218 = por %p216, %p217
      %s220 = sadd.s32 %s219, 1
      %p223 = scmp.eq.s32.totalorder %s21, 1
      %p224 = scmp.ne.s32.totalorder %s219, %s221
      %p225 = scmp.eq.s32.totalorder %s21, 0
      %p226 = por %p224, %p225
      %p227 = scmp.ne.s32.totalorder %s219, %s221
      %p228 = scmp.eq.s32.totalorder %s26, 1
      %p229 = por %p227, %p228
      %p230 = scmp.ne.s32.totalorder %s221, %s222
      %p231 = scmp.eq.s32.totalorder %s26, 0
      %p232 = por %p230, %p231
      %p233 = scmp.ne.s32.totalorder %s221, %s222
      %p234 = scmp.eq.s32.totalorder %s27, 1
      %p235 = por %p233, %p234
      %p237 = scmp.ne.s32.totalorder %s222, %s236
      %p238 = scmp.eq.s32.totalorder %s27, 0
      %p239 = por %p237, %p238
      %s241 = sadd.s32 %s240, 1
      %p244 = scmp.eq.s32.totalorder %s21, 1
      %p245 = scmp.ne.s32.totalorder %s240, %s242
      %p246 = scmp.eq.s32.totalorder %s21, 0
      %p247 = por %p245, %p246
      %p248 = scmp.ne.s32.totalorder %s240, %s242
      %p249 = scmp.eq.s32.totalorder %s26, 1
      %p250 = por %p248, %p249
      %p251 = scmp.ne.s32.totalorder %s242, %s243
      %p252 = scmp.eq.s32.totalorder %s26, 0
      %p253 = por %p251, %p252
      %p254 = scmp.ne.s32.totalorder %s242, %s243
      %p255 = scmp.eq.s32.totalorder %s27, 1
      %p256 = por %p254, %p255
      %p258 = scmp.ne.s32.totalorder %s243, %s257
      %p259 = scmp.eq.s32.totalorder %s27, 0
      %p260 = por %p258, %p259
      %s262 = sadd.s32 %s261, 1
      %p265 = scmp.eq.s32.totalorder %s21, 1
      %p266 = scmp.ne.s32.totalorder %s261, %s263
      %p267 = scmp.eq.s32.totalorder %s21, 0
      %p268 = por %p266, %p267
      %p269 = scmp.ne.s32.totalorder %s261, %s263
      %p270 = scmp.eq.s32.totalorder %s26, 1
      %p271 = por %p269, %p270
      %p272 = scmp.ne.s32.totalorder %s263, %s264
      %p273 = scmp.eq.s32.totalorder %s26, 0
      %p274 = por %p272, %p273
      %p275 = scmp.ne.s32.totalorder %s263, %s264
      %p276 = scmp.eq.s32.totalorder %s27, 1
      %p277 = por %p275, %p276
      %p279 = scmp.ne.s32.totalorder %s264, %s278
      %p280 = scmp.eq.s32.totalorder %s27, 0
      %p281 = por %p279, %p280
      %s282 = ssub.s32 1, %s28
      %s283 = smul.u32 %s282, %s29
      %s284 = ssub.s32 1, %s40
      %s285 = smul.u32 %s284, %s36
      %s286 = ssub.s32 %s283, %s285
      %p287 = scmp.eq.s32.totalorder %s286, 0
      %s289 = sadd.s32 %s288, 1
      %s290 = scalar_select %p287, %s288, %s289
      %p293 = pneg %p287
      %p294 = scmp.eq.s32.totalorder %s21, 1
      %p295 = por %p293, %p294
      %p296 = scmp.ne.s32.totalorder %s288, %s291
      %p297 = scmp.eq.s32.totalorder %s21, 0
      %p298 = por %p296, %p297
      %p299 = scmp.ne.s32.totalorder %s288, %s291
      %p300 = scmp.eq.s32.totalorder %s26, 1
      %p301 = por %p299, %p300
      %p302 = scmp.ne.s32.totalorder %s291, %s292
      %p303 = scmp.eq.s32.totalorder %s26, 0
      %p304 = por %p302, %p303
      %p305 = scmp.ne.s32.totalorder %s291, %s292
      %p306 = scmp.eq.s32.totalorder %s27, 1
      %p307 = por %p305, %p306
      %p309 = scmp.ne.s32.totalorder %s292, %s308
      %p310 = scmp.eq.s32.totalorder %s27, 0
      %p311 = por %p309, %p310
      %p312 = scmp.le.s32.totalorder 1, %s21
      %p313 = scmp.lt.s32.totalorder %s21, 3
      %p314 = pnand %p312, %p313
      %p315 = pneg %p314
      // Predicated region
      $region9: #{dscom_forward.1} parent=5 // pred_check
        _
      $region10: #{dscom_forward.1} parent=5 // pred_check_branch
        %317 = sbr.rel (%p314) target = $region12
      $region11: #{dscom_forward.1} parent=5 // pred_region
        %s318 = ssub.s32 %s21, 1
        // Predicated region
        $region13: #{dscom_forward.1} parent=11 // pred_check
          %p319 = pneg %p54
        $region14: #{dscom_forward.1} parent=11 // pred_check_branch
          %321 = sbr.rel (%p319) target = $region16
        $region15: #{dscom_forward.1} parent=11 // pred_region
          _
        $region16: #{dscom_forward.1} parent=11 // pred_fallthru
          _
        // Predicated region
        $region17: #{dscom_forward.1} parent=11 // pred_check
          %p322 = pneg %p80
        $region18: #{dscom_forward.1} parent=11 // pred_check_branch
          %324 = sbr.rel (%p322) target = $region20
        $region19: #{dscom_forward.1} parent=11 // pred_region
          %p325 = scmp.lt.s32.totalorder %s31, 0
          %s326 = scalar_select %p325, %s31, 0
          %s327 = scalar_lea.vmem %s1, %s326
        $region20: #{dscom_forward.1} parent=11 // pred_fallthru
          _
        // Predicated region
        $region21: #{dscom_forward.1} parent=11 // pred_check
          %p328 = pneg %p106
        $region22: #{dscom_forward.1} parent=11 // pred_check_branch
          %330 = sbr.rel (%p328) target = $region24
        $region23: #{dscom_forward.1} parent=11 // pred_region
          %p331 = scmp.lt.s32.totalorder %s31, 0
          %s332 = scalar_select %p331, %s31, 0
          %s333 = scalar_lea.vmem %s2, %s332
        $region24: #{dscom_forward.1} parent=11 // pred_fallthru
          _
        // Predicated region
        $region25: #{dscom_forward.1} parent=11 // pred_check
          %p334 = pneg %p127
        $region26: #{dscom_forward.1} parent=11 // pred_check_branch
          %336 = sbr.rel (%p334) target = $region28
        $region27: #{dscom_forward.1} parent=11 // pred_region
          _
        $region28: #{dscom_forward.1} parent=11 // pred_fallthru
          _
        // Predicated region
        $region29: #{dscom_forward.1} parent=11 // pred_check
          %p337 = pneg %p148
        $region30: #{dscom_forward.1} parent=11 // pred_check_branch
          %339 = sbr.rel (%p337) target = $region32
        $region31: #{dscom_forward.1} parent=11 // pred_region
          _
        $region32: #{dscom_forward.1} parent=11 // pred_fallthru
          _
        // Predicated region
        $region33: #{dscom_forward.1} parent=11 // pred_check
          %p340 = pneg %p169
        $region34: #{dscom_forward.1} parent=11 // pred_check_branch
          %342 = sbr.rel (%p340) target = $region36
        $region35: #{dscom_forward.1} parent=11 // pred_region
          _
        $region36: #{dscom_forward.1} parent=11 // pred_fallthru
          _
        // Predicated region
        $region37: #{dscom_forward.1} parent=11 // pred_check
          %p343 = pneg %p190
        $region38: #{dscom_forward.1} parent=11 // pred_check_branch
          %345 = sbr.rel (%p343) target = $region40
        $region39: #{dscom_forward.1} parent=11 // pred_region
          _
        $region40: #{dscom_forward.1} parent=11 // pred_fallthru
          _
        // Predicated region
        $region41: #{dscom_forward.1} parent=11 // pred_check
          %p346 = pneg %p211
        $region42: #{dscom_forward.1} parent=11 // pred_check_branch
          %348 = sbr.rel (%p346) target = $region44
        $region43: #{dscom_forward.1} parent=11 // pred_region
          _
        $region44: #{dscom_forward.1} parent=11 // pred_fallthru
          _
        // Predicated region
        $region45: #{dscom_forward.1} parent=11 // pred_check
          %p349 = pneg %p232
        $region46: #{dscom_forward.1} parent=11 // pred_check_branch
          %351 = sbr.rel (%p349) target = $region48
        $region47: #{dscom_forward.1} parent=11 // pred_region
          _
        $region48: #{dscom_forward.1} parent=11 // pred_fallthru
          _
        // Predicated region
        $region49: #{dscom_forward.1} parent=11 // pred_check
          %p352 = pneg %p253
        $region50: #{dscom_forward.1} parent=11 // pred_check_branch
          %354 = sbr.rel (%p352) target = $region52
        $region51: #{dscom_forward.1} parent=11 // pred_region
          _
        $region52: #{dscom_forward.1} parent=11 // pred_fallthru
          _
      $region12: #{dscom_forward.1} parent=5 // pred_fallthru
        _
      %p355 = scmp.lt.s32.totalorder %s21, 2
      // Predicated region
      $region53: #{dscom_forward.1} parent=5 // pred_check
        %p356 = pneg %p355
      $region54: #{dscom_forward.1} parent=5 // pred_check_branch
        %358 = sbr.rel (%p356) target = $region56
      $region55: #{dscom_forward.1} parent=5 // pred_region
        _
      $region56: #{dscom_forward.1} parent=5 // pred_fallthru
        _
      %p359 = scmp.le.s32.totalorder 1, %s21
      %p360 = scmp.lt.s32.totalorder %s21, 3
      %p361 = pnand %p359, %p360
      %p362 = pneg %p361
      // Predicated region
      $region57: #{dscom_forward.1} parent=5 // pred_check
        _
      $region58: #{dscom_forward.1} parent=5 // pred_check_branch
        %364 = sbr.rel (%p361) target = $region60
      $region59: #{dscom_forward.1} parent=5 // pred_region
        %s365 = ssub.s32 %s21, 1
        %p366 = pneg %p54
        %p367 = pneg %p51
        %p368 = scmp.lt.s32.totalorder %s31, 0
        %s369 = scalar_select %p368, %s31, 0
        %s370 = scalar_lea.vmem %s1, %s369
        %p371 = pneg %p80
        %p372 = pneg %p77
        %p373 = scmp.lt.s32.totalorder %s31, 0
        %s374 = scalar_select %p373, %s31, 0
        %s375 = scalar_lea.vmem %s2, %s374
        %p376 = pneg %p106
        %p377 = pneg %p103
        %p378 = pneg %p127
        %p379 = pneg %p124
        %p380 = pneg %p148
        %p381 = pneg %p145
        %p382 = pneg %p169
        %p383 = pneg %p166
        %p384 = pneg %p190
        %p385 = pneg %p187
        %p386 = pneg %p211
        %p387 = pneg %p208
        %p388 = pneg %p232
        %p389 = pneg %p229
        %p390 = pneg %p253
        %p391 = pneg %p250
        %p392 = pneg %p274
        %p393 = pneg %p271
        %p394 = pneg %p304
        %p395 = pneg %p301
        %s396 = sand.u32 %s291, 1
        %s397 = scalar_lea.sflag [#allocation9], %s396
        %s398 = sand.u32 %s291, 1
        %s399 = smul.addr %s398, 8
        %s400 = scalar_lea.vmem [#allocation8], %s399
        %p401 = scmp.lt.s32.totalorder %s31, 0
        %s402 = scalar_select %p401, %s31, 0
        %s403 = scalar_lea.vmem %s1, %s402
        %p404 = scmp.lt.s32.totalorder %s31, 0
        %s405 = scalar_select %p404, %s31, 0
        %s406 = scalar_lea.vmem %s2, %s405
        %s407 = ssub.s32 1, %s30
        %s408 = smul.u32 %s407, %s31
        %v410 = vlaneseq
        %v411 = vshrl.u32 %v410, 7
        %v412 = vadd.s32 %v411, 8
        %v413 = vadd.s32 %v411, 16
        %v414 = vadd.s32 %v411, 24
        %v415 = vadd.s32 %v411, 32
        %v416 = vadd.s32 %v411, 40
        %v417 = vadd.s32 %v411, 48
        %v418 = vadd.s32 %v411, 56
        %v419 = vadd.s32 %v411, 64
        %v420 = vadd.s32 %v411, 72
        %v421 = vadd.s32 %v411, 80
        %v422 = vadd.s32 %v411, 88
        %v423 = vadd.s32 %v411, 96
        %v424 = vadd.s32 %v411, 104
        %v425 = vadd.s32 %v411, 112
        %v426 = vadd.s32 %v411, 120
        %v427 = vld [vmem:[%s403] sm:$0x1]
        %v428 = vlaneseq
        %v429 = vshrl.u32 %v428, 7
        %v430 = vsub.s32 0, %v429
        %v431 = vrot.slane %v427, %v430
        %vm432 = vcmp.eq.s32.totalorder %v411, %v431
        %vm433 = vcmp.eq.s32.totalorder %v412, %v431
        %vm434 = vcmp.eq.s32.totalorder %v413, %v431
        %vm435 = vcmp.eq.s32.totalorder %v414, %v431
        %vm436 = vcmp.eq.s32.totalorder %v415, %v431
        %vm437 = vcmp.eq.s32.totalorder %v416, %v431
        %vm438 = vcmp.eq.s32.totalorder %v417, %v431
        %vm439 = vcmp.eq.s32.totalorder %v418, %v431
        %vm440 = vcmp.eq.s32.totalorder %v419, %v431
        %vm441 = vcmp.eq.s32.totalorder %v420, %v431
        %vm442 = vcmp.eq.s32.totalorder %v421, %v431
        %vm443 = vcmp.eq.s32.totalorder %v422, %v431
        %vm444 = vcmp.eq.s32.totalorder %v423, %v431
        %vm445 = vcmp.eq.s32.totalorder %v424, %v431
        %vm446 = vcmp.eq.s32.totalorder %v425, %v431
        %vm447 = vcmp.eq.s32.totalorder %v426, %v431
        %v448 = vsel %vm432, 1, 0
        %v449 = vsel %vm433, 1, 0
        %v450 = vsel %vm434, 1, 0
        %v451 = vsel %vm435, 1, 0
        %v452 = vsel %vm436, 1, 0
        %v453 = vsel %vm437, 1, 0
        %v454 = vsel %vm438, 1, 0
        %v455 = vsel %vm439, 1, 0
        %v456 = vsel %vm440, 1, 0
        %v457 = vsel %vm441, 1, 0
        %v458 = vsel %vm442, 1, 0
        %v459 = vsel %vm443, 1, 0
        %v460 = vsel %vm444, 1, 0
        %v461 = vsel %vm445, 1, 0
        %v462 = vsel %vm446, 1, 0
        %v463 = vsel %vm447, 1, 0
        %v464 = vcvt.s32.f32 %v448
        %v465 = vcvt.s32.f32 %v449
        %v466 = vcvt.s32.f32 %v450
        %v467 = vcvt.s32.f32 %v451
        %v468 = vcvt.s32.f32 %v452
        %v469 = vcvt.s32.f32 %v453
        %v470 = vcvt.s32.f32 %v454
        %v471 = vcvt.s32.f32 %v455
        %v472 = vcvt.s32.f32 %v456
        %v473 = vcvt.s32.f32 %v457
        %v474 = vcvt.s32.f32 %v458
        %v475 = vcvt.s32.f32 %v459
        %v476 = vcvt.s32.f32 %v460
        %v477 = vcvt.s32.f32 %v461
        %v478 = vcvt.s32.f32 %v462
        %v479 = vcvt.s32.f32 %v463
        %v480 = vpack.c.bf16 %v465, %v464
        %v481 = vpack.c.bf16 %v467, %v466
        %v482 = vpack.c.bf16 %v469, %v468
        %v483 = vpack.c.bf16 %v471, %v470
        %v484 = vpack.c.bf16 %v473, %v472
        %v485 = vpack.c.bf16 %v475, %v474
        %v486 = vpack.c.bf16 %v477, %v476
        %v487 = vpack.c.bf16 %v479, %v478
        %v488 = vld [vmem:[%s406] sm:$0x1]
        %v489 = vlaneseq
        %v490 = vshrl.u32 %v489, 7
        %v491 = vsub.s32 0, %v490
        %v492 = vrot.slane %v488, %v491
        %vm493 = vcmp.eq.s32.totalorder %v411, %v492
        %vm494 = vcmp.eq.s32.totalorder %v412, %v492
        %vm495 = vcmp.eq.s32.totalorder %v413, %v492
        %vm496 = vcmp.eq.s32.totalorder %v414, %v492
        %vm497 = vcmp.eq.s32.totalorder %v415, %v492
        %vm498 = vcmp.eq.s32.totalorder %v416, %v492
        %vm499 = vcmp.eq.s32.totalorder %v417, %v492
        %vm500 = vcmp.eq.s32.totalorder %v418, %v492
        %vm501 = vcmp.eq.s32.totalorder %v419, %v492
        %vm502 = vcmp.eq.s32.totalorder %v420, %v492
        %vm503 = vcmp.eq.s32.totalorder %v421, %v492
        %vm504 = vcmp.eq.s32.totalorder %v422, %v492
        %vm505 = vcmp.eq.s32.totalorder %v423, %v492
        %vm506 = vcmp.eq.s32.totalorder %v424, %v492
        %vm507 = vcmp.eq.s32.totalorder %v425, %v492
        %vm508 = vcmp.eq.s32.totalorder %v426, %v492
        %v509 = vsel %vm493, 1, 0
        %v510 = vsel %vm494, 1, 0
        %v511 = vsel %vm495, 1, 0
        %v512 = vsel %vm496, 1, 0
        %v513 = vsel %vm497, 1, 0
        %v514 = vsel %vm498, 1, 0
        %v515 = vsel %vm499, 1, 0
        %v516 = vsel %vm500, 1, 0
        %v517 = vsel %vm501, 1, 0
        %v518 = vsel %vm502, 1, 0
        %v519 = vsel %vm503, 1, 0
        %v520 = vsel %vm504, 1, 0
        %v521 = vsel %vm505, 1, 0
        %v522 = vsel %vm506, 1, 0
        %v523 = vsel %vm507, 1, 0
        %v524 = vsel %vm508, 1, 0
        %v525 = vcvt.s32.f32 %v509
        %v526 = vcvt.s32.f32 %v510
        %v527 = vcvt.s32.f32 %v511
        %v528 = vcvt.s32.f32 %v512
        %v529 = vcvt.s32.f32 %v513
        %v530 = vcvt.s32.f32 %v514
        %v531 = vcvt.s32.f32 %v515
        %v532 = vcvt.s32.f32 %v516
        %v533 = vcvt.s32.f32 %v517
        %v534 = vcvt.s32.f32 %v518
        %v535 = vcvt.s32.f32 %v519
        %v536 = vcvt.s32.f32 %v520
        %v537 = vcvt.s32.f32 %v521
        %v538 = vcvt.s32.f32 %v522
        %v539 = vcvt.s32.f32 %v523
        %v540 = vcvt.s32.f32 %v524
        %v541 = vpack.c.bf16 %v526, %v525
        %v542 = vpack.c.bf16 %v528, %v527
        %v543 = vpack.c.bf16 %v530, %v529
        %v544 = vpack.c.bf16 %v532, %v531
        %v545 = vpack.c.bf16 %v534, %v533
        %v546 = vpack.c.bf16 %v536, %v535
        %v547 = vpack.c.bf16 %v538, %v537
        %v548 = vpack.c.bf16 %v540, %v539
        %p549 = scmp.eq.s32.totalorder %s30, 0
        // Predicated region
        $region61: #{dscom_forward.1} parent=59 // pred_check
          %p550 = pneg %p549
        $region62: #{dscom_forward.1} parent=59 // pred_check_branch
          %552 = sbr.rel (%p550) target = $region64
        $region63: #{dscom_forward.1} parent=59 // pred_region
          %p553 = scmp.eq.s32.totalorder %s31, 0
          // Predicated region
          $region65: #{dscom_forward.1} parent=63 // pred_check
            %p554 = pneg %p553
          $region66: #{dscom_forward.1} parent=63 // pred_check_branch
            %556 = sbr.rel (%p554) target = $region68
          $region67: #{dscom_forward.1} parent=63 // pred_region
            %v557 = vld [vmem:[%s3] sm:$0xf]
            %v558 = vld [vmem:[%s3 + $0x4] sm:$0xf]
            %v559 = vld [vmem:[%s3 + $0x8] sm:$0xf]
            %v560 = vld [vmem:[%s3 + $0xc] sm:$0xf]
            %v561 = vld [vmem:[%s3 + $0x10] sm:$0xf]
            %v562 = vld [vmem:[%s3 + $0x14] sm:$0xf]
            %v563 = vld [vmem:[%s3 + $0x18] sm:$0xf]
            %v564 = vld [vmem:[%s3 + $0x1c] sm:$0xf]
            %v565 = vld [vmem:[%s0] sm:$0xf]
            %v566 = vld [vmem:[%s0 + $0x4] sm:$0xf]
            %v567 = vld [vmem:[%s0 + $0x8] sm:$0xf]
            %v568 = vld [vmem:[%s0 + $0xc] sm:$0xf]
            %v569 = vld [vmem:[%s0 + $0x10] sm:$0xf]
            %v570 = vld [vmem:[%s0 + $0x14] sm:$0xf]
            %v571 = vld [vmem:[%s0 + $0x18] sm:$0xf]
            %v572 = vld [vmem:[%s0 + $0x1c] sm:$0xf]
            %v573 = vld [vmem:[%s0 + $0x20] sm:$0xf]
            %v574 = vld [vmem:[%s0 + $0x24] sm:$0xf]
            %v575 = vld [vmem:[%s0 + $0x28] sm:$0xf]
            %v576 = vld [vmem:[%s0 + $0x2c] sm:$0xf]
            %v577 = vld [vmem:[%s0 + $0x30] sm:$0xf]
            %v578 = vld [vmem:[%s0 + $0x34] sm:$0xf]
            %v579 = vld [vmem:[%s0 + $0x38] sm:$0xf]
            %v580 = vld [vmem:[%s0 + $0x3c] sm:$0xf]
            %v589 = vunpack.c.l.b16 %v557
            %v590 = vunpack.c.l.b16 %v558
            %v591 = vunpack.c.l.b16 %v559
            %v592 = vunpack.c.l.b16 %v560
            %v593 = vunpack.c.l.b16 %v561
            %v594 = vunpack.c.l.b16 %v562
            %v595 = vunpack.c.l.b16 %v563
            %v596 = vunpack.c.l.b16 %v564
            %v597 = vpack.c.b16 %v590, %v589
            %v598 = vpack.c.b16 %v592, %v591
            %v599 = vpack.c.b16 %v594, %v593
            %v600 = vpack.c.b16 %v596, %v595
            %v617 = vunpack.c.l.b16 %v565
            %v618 = vunpack.c.l.b16 %v566
            %v619 = vunpack.c.l.b16 %v567
            %v620 = vunpack.c.l.b16 %v568
            %v621 = vunpack.c.l.b16 %v569
            %v622 = vunpack.c.l.b16 %v570
            %v623 = vunpack.c.l.b16 %v571
            %v624 = vunpack.c.l.b16 %v572
            %v625 = vunpack.c.l.b16 %v573
            %v626 = vunpack.c.l.b16 %v574
            %v627 = vunpack.c.l.b16 %v575
            %v628 = vunpack.c.l.b16 %v576
            %v629 = vunpack.c.l.b16 %v577
            %v630 = vunpack.c.l.b16 %v578
            %v631 = vunpack.c.l.b16 %v579
            %v632 = vunpack.c.l.b16 %v580
            %v633 = vpack.c.b16 %v618, %v617
            %v634 = vpack.c.b16 %v620, %v619
            %v635 = vpack.c.b16 %v622, %v621
            %v636 = vpack.c.b16 %v624, %v623
            %v637 = vpack.c.b16 %v626, %v625
            %v638 = vpack.c.b16 %v628, %v627
            %v639 = vpack.c.b16 %v630, %v629
            %v640 = vpack.c.b16 %v632, %v631
            %vm641 = vcmask 130048
            %v643 = vsel %vm641, %v597, 0
            %v646 = vsel %vm641, %v598, 0
            %v649 = vsel %vm641, %v599, 0
            %v652 = vsel %vm641, %v600, 0
            %v655 = vsel %vm641, %v633, 0
            %v658 = vsel %vm641, %v634, 0
            %v661 = vsel %vm641, %v635, 0
            %v664 = vsel %vm641, %v636, 0
            %v667 = vsel %vm641, %v637, 0
            %v670 = vsel %vm641, %v638, 0
            %v673 = vsel %vm641, %v639, 0
            %v676 = vsel %vm641, %v640, 0
            %678 = vmatprep.subr.bf16.mxu0 0
            %679 = vmatpush1.bf16.xpose.msra.mxu0 %v655
            %680 = vmatprep.subr.bf16.mxu0 0
            %681 = vmatpush1.bf16.xpose.msra.mxu0 %v658
            %682 = vmatprep.subr.bf16.mxu0 0
            %683 = vmatpush1.bf16.xpose.msra.mxu0 %v661
            %684 = vmatprep.subr.bf16.mxu0 0
            %685 = vmatpush1.bf16.xpose.msra.mxu0 %v664
            %686 = vmatprep.subr.bf16.mxu0 0
            %687 = vmatpush1.bf16.xpose.msra.mxu0 %v667
            %688 = vmatprep.subr.bf16.mxu0 0
            %689 = vmatpush1.bf16.xpose.msra.mxu0 %v670
            %690 = vmatprep.subr.bf16.mxu0 0
            %691 = vmatpush1.bf16.xpose.msra.mxu0 %v673
            %692 = vmatprep.subr.bf16.mxu0 0
            %693 = vmatpush1.bf16.xpose.msra.mxu0 %v676
            %694 = vmatprep.subr.bf16.mxu0 0
            %695 = vmatpush1.bf16.xpose.msra.mxu0 0
            %696 = vmatprep.subr.bf16.mxu0 0
            %697 = vmatpush1.bf16.xpose.msra.mxu0 0
            %698 = vmatprep.subr.bf16.mxu0 0
            %699 = vmatpush1.bf16.xpose.msra.mxu0 0
            %700 = vmatprep.subr.bf16.mxu0 0
            %701 = vmatpush1.bf16.xpose.msra.mxu0 0
            %702 = vmatprep.subr.bf16.mxu0 0
            %703 = vmatpush1.bf16.xpose.msra.mxu0 0
            %704 = vmatprep.subr.bf16.mxu0 0
            %705 = vmatpush1.bf16.xpose.msra.mxu0 0
            %706 = vmatprep.subr.bf16.mxu0 0
            %707 = vmatpush1.bf16.xpose.msra.mxu0 0
            %708 = vmatprep.subr.bf16.mxu0 0
            %709 = vmatpush1.bf16.xpose.msra.mxu0 0
            %710 = vmatprep.mubr.bf16.mxu0 0
            %711 = vmatmul.mubr.bf16.gmra.mrb[0].mxu0 %v643
            %v712 = vpop.f32.mrb[0].mxu0
            %v713 = vadd.f32 0.0, %v712
            %v714 = vpop.f32.mrb[0].mxu0
            %v715 = vpop.f32.mrb[0].mxu0
            %v716 = vadd.f32 0.0, %v715
            %v717 = vpop.f32.mrb[0].mxu0
            %718 = vmatprep.mubr.bf16.mxu0 0
            %719 = vmatmul.mubr.bf16.gmra.mrb[0].mxu0 %v646
            %v720 = vpop.f32.mrb[0].mxu0
            %v721 = vadd.f32 0.0, %v720
            %v722 = vpop.f32.mrb[0].mxu0
            %v723 = vpop.f32.mrb[0].mxu0
            %v724 = vadd.f32 0.0, %v723
            %v725 = vpop.f32.mrb[0].mxu0
            %726 = vmatprep.mubr.bf16.mxu0 0
            %727 = vmatmul.mubr.bf16.gmra.mrb[0].mxu0 %v649
            %v728 = vpop.f32.mrb[0].mxu0
            %v729 = vadd.f32 0.0, %v728
            %v730 = vpop.f32.mrb[0].mxu0
            %v731 = vpop.f32.mrb[0].mxu0
            %v732 = vadd.f32 0.0, %v731
            %v733 = vpop.f32.mrb[0].mxu0
            %734 = vmatprep.mubr.bf16.mxu0 0
            %735 = vmatmul.mubr.bf16.gmra.mrb[0].mxu0 %v652
            %v736 = vpop.f32.mrb[0].mxu0
            %v737 = vadd.f32 0.0, %v736
            %v738 = vpop.f32.mrb[0].mxu0
            %v739 = vpop.f32.mrb[0].mxu0
            %v740 = vadd.f32 0.0, %v739
            %v741 = vpop.f32.mrb[0].mxu0
            %742 = vdwg.mxu0
            %v743 = vpack.c.bf16 %v716, %v713
            %v744 = vpack.c.bf16 %v724, %v721
            %v745 = vpack.c.bf16 %v732, %v729
            %v746 = vpack.c.bf16 %v740, %v737
            %v747 = vpack.c.bf16 1.0, 1.0
            %v753 = vunpack.c.l.b16 %v743
            %v754 = vunpack.c.h.b16 %v743
            %v755 = vunpack.c.l.b16 %v744
            %v756 = vunpack.c.h.b16 %v744
            %v757 = vunpack.c.l.b16 %v745
            %v758 = vunpack.c.h.b16 %v745
            %v759 = vunpack.c.l.b16 %v746
            %v760 = vunpack.c.h.b16 %v746
            %v761 = vunpack.c.l.b16 %v747
            %v762 = vpack.c.b16 %v753, %v753
            %v763 = vpack.c.b16 %v754, %v754
            %v764 = vpack.c.b16 %v755, %v755
            %v765 = vpack.c.b16 %v756, %v756
            %v766 = vpack.c.b16 %v757, %v757
            %v767 = vpack.c.b16 %v758, %v758
            %v768 = vpack.c.b16 %v759, %v759
            %v769 = vpack.c.b16 %v760, %v760
            %v770 = vpack.c.b16 %v761, %v761
            %780 = vst [vmem:[#allocation2] sm:$0xf] %v762
            %781 = vst [vmem:[#allocation2 + $0x4] sm:$0xf] %v763
            %782 = vst [vmem:[#allocation2 + $0x8] sm:$0xf] %v764
            %783 = vst [vmem:[#allocation2 + $0xc] sm:$0xf] %v765
            %784 = vst [vmem:[#allocation2 + $0x10] sm:$0xf] %v766
            %785 = vst [vmem:[#allocation2 + $0x14] sm:$0xf] %v767
            %786 = vst [vmem:[#allocation2 + $0x18] sm:$0xf] %v768
            %787 = vst [vmem:[#allocation2 + $0x1c] sm:$0xf] %v769
            %788 = vst [vmem:[#allocation2 + $0x20] sm:$0xf] %v770
            %v789 = vld [vmem:[%s4] sm:$0xf]
            %v790 = vld [vmem:[%s4 + $0x4] sm:$0xf]
            %v793 = vunpack.c.l.b16 %v789
            %v794 = vunpack.c.l.b16 %v790
            %v795 = vpack.c.b16 %v794, %v793
            %vm796 = vcmask 523264
            %v798 = vsel %vm796, %v795, 0
            %800 = vmatprep.subr.bf16.mxu0 0
            %801 = vmatpush1.bf16.msra.mxu0 %v743
            %802 = vmatprep.subr.bf16.mxu0 0
            %803 = vmatpush1.bf16.msra.mxu0 %v744
            %804 = vmatprep.subr.bf16.mxu0 0
            %805 = vmatpush1.bf16.msra.mxu0 %v745
            %806 = vmatprep.subr.bf16.mxu0 0
            %807 = vmatpush1.bf16.msra.mxu0 %v746
            %808 = vmatprep.subr.bf16.mxu0 0
            %809 = vmatpush1.bf16.msra.mxu0 0
            %810 = vmatprep.subr.bf16.mxu0 0
            %811 = vmatpush1.bf16.msra.mxu0 0
            %812 = vmatprep.subr.bf16.mxu0 0
            %813 = vmatpush1.bf16.msra.mxu0 0
            %814 = vmatprep.subr.bf16.mxu0 0
            %815 = vmatpush1.bf16.msra.mxu0 0
            %816 = vmatprep.subr.bf16.mxu0 0
            %817 = vmatpush1.bf16.msra.mxu0 0
            %818 = vmatprep.subr.bf16.mxu0 0
            %819 = vmatpush1.bf16.msra.mxu0 0
            %820 = vmatprep.subr.bf16.mxu0 0
            %821 = vmatpush1.bf16.msra.mxu0 0
            %822 = vmatprep.subr.bf16.mxu0 0
            %823 = vmatpush1.bf16.msra.mxu0 0
            %824 = vmatprep.subr.bf16.mxu0 0
            %825 = vmatpush1.bf16.msra.mxu0 0
            %826 = vmatprep.subr.bf16.mxu0 0
            %827 = vmatpush1.bf16.msra.mxu0 0
            %828 = vmatprep.subr.bf16.mxu0 0
            %829 = vmatpush1.bf16.msra.mxu0 0
            %830 = vmatprep.subr.bf16.mxu0 0
            %831 = vmatpush1.bf16.msra.mxu0 0
            %832 = vmatprep.mubr.bf16.mxu0 0
            %833 = vmatmul.mubr.bf16.gmra.mrb[0].mxu0 %v798
            %v834 = vpop.f32.mrb[0].mxu0
            %v835 = vadd.f32 0.0, %v834
            %v836 = vpop.f32.mrb[0].mxu0
            %v837 = vpop.f32.mrb[0].mxu0
            %v838 = vadd.f32 0.0, %v837
            %v839 = vpop.f32.mrb[0].mxu0
            %840 = vdwg.mxu0
            %841 = vst [vmem:[#allocation3] sm:$0xff] %v835
            %842 = vst [vmem:[#allocation3 + $0x8] sm:$0xff] %v838
            %843 = vst [vmem:[#allocation4] sm:$0xff] 0.0
            %844 = vst [vmem:[#allocation4 + $0x8] sm:$0xff] 0.0
            %845 = vst [vmem:[#allocation4 + $0x10] sm:$0xff] 0.0
            %846 = vst [vmem:[#allocation4 + $0x18] sm:$0xff] 0.0
            %847 = vst [vmem:[#allocation4 + $0x20] sm:$0xff] 0.0
            %848 = vst [vmem:[#allocation4 + $0x28] sm:$0xff] 0.0
            %849 = vst [vmem:[#allocation4 + $0x30] sm:$0xff] 0.0
            %850 = vst [vmem:[#allocation4 + $0x38] sm:$0xff] 0.0
            %851 = vst [vmem:[#allocation4 + $0x40] sm:$0xff] 0.0
          $region68: #{dscom_forward.1} parent=63 // pred_fallthru
            _
          %v852 = vld [vmem:[#allocation3] sm:$0xff]
          %v853 = vld [vmem:[#allocation3 + $0x8] sm:$0xff]
          %v854 = vpack.c.bf16 %v852, %v852
          %v855 = vpack.c.bf16 %v853, %v853
          %856 = vmatprep.subr.bf16.mxu0 0
          %857 = vmatpush1.bf16.msra.mxu0 %v541
          %858 = vmatprep.subr.bf16.mxu0 0
          %859 = vmatpush1.bf16.msra.mxu0 %v542
          %860 = vmatprep.subr.bf16.mxu0 0
          %861 = vmatpush1.bf16.msra.mxu0 %v543
          %862 = vmatprep.subr.bf16.mxu0 0
          %863 = vmatpush1.bf16.msra.mxu0 %v544
          %864 = vmatprep.subr.bf16.mxu0 0
          %865 = vmatpush1.bf16.msra.mxu0 %v545
          %866 = vmatprep.subr.bf16.mxu0 0
          %867 = vmatpush1.bf16.msra.mxu0 %v546
          %868 = vmatprep.subr.bf16.mxu0 0
          %869 = vmatpush1.bf16.msra.mxu0 %v547
          %870 = vmatprep.subr.bf16.mxu0 0
          %871 = vmatpush1.bf16.msra.mxu0 %v548
          %872 = vmatprep.subr.bf16.mxu0 0
          %873 = vmatpush1.bf16.msra.mxu0 0
          %874 = vmatprep.subr.bf16.mxu0 0
          %875 = vmatpush1.bf16.msra.mxu0 0
          %876 = vmatprep.subr.bf16.mxu0 0
          %877 = vmatpush1.bf16.msra.mxu0 0
          %878 = vmatprep.subr.bf16.mxu0 0
          %879 = vmatpush1.bf16.msra.mxu0 0
          %880 = vmatprep.subr.bf16.mxu0 0
          %881 = vmatpush1.bf16.msra.mxu0 0
          %882 = vmatprep.subr.bf16.mxu0 0
          %883 = vmatpush1.bf16.msra.mxu0 0
          %884 = vmatprep.subr.bf16.mxu0 0
          %885 = vmatpush1.bf16.msra.mxu0 0
          %886 = vmatprep.subr.bf16.mxu0 0
          %887 = vmatpush1.bf16.msra.mxu0 0
          %888 = vmatprep.mubr.bf16.mxu0 0
          %889 = vmatmul.mubr.bf16.gmra.mrb[0].mxu0 %v855
          %v890 = vpop.f32.mrb[0].mxu0
          %v891 = vadd.f32 0.0, %v890
          %v892 = vpop.f32.mrb[0].mxu0
          %v893 = vpop.f32.mrb[0].mxu0
          %v894 = vpop.f32.mrb[0].mxu0
          %895 = vdwg.mxu0
          %896 = vmatprep.subr.bf16.mxu0 0
          %897 = vmatpush1.bf16.msra.mxu0 %v480
          %898 = vmatprep.subr.bf16.mxu0 0
          %899 = vmatpush1.bf16.msra.mxu0 %v481
          %900 = vmatprep.subr.bf16.mxu0 0
          %901 = vmatpush1.bf16.msra.mxu0 %v482
          %902 = vmatprep.subr.bf16.mxu0 0
          %903 = vmatpush1.bf16.msra.mxu0 %v483
          %904 = vmatprep.subr.bf16.mxu0 0
          %905 = vmatpush1.bf16.msra.mxu0 %v484
          %906 = vmatprep.subr.bf16.mxu0 0
          %907 = vmatpush1.bf16.msra.mxu0 %v485
          %908 = vmatprep.subr.bf16.mxu0 0
          %909 = vmatpush1.bf16.msra.mxu0 %v486
          %910 = vmatprep.subr.bf16.mxu0 0
          %911 = vmatpush1.bf16.msra.mxu0 %v487
          %912 = vmatprep.subr.bf16.mxu0 0
          %913 = vmatpush1.bf16.msra.mxu0 0
          %914 = vmatprep.subr.bf16.mxu0 0
          %915 = vmatpush1.bf16.msra.mxu0 0
          %916 = vmatprep.subr.bf16.mxu0 0
          %917 = vmatpush1.bf16.msra.mxu0 0
          %918 = vmatprep.subr.bf16.mxu0 0
          %919 = vmatpush1.bf16.msra.mxu0 0
          %920 = vmatprep.subr.bf16.mxu0 0
          %921 = vmatpush1.bf16.msra.mxu0 0
          %922 = vmatprep.subr.bf16.mxu0 0
          %923 = vmatpush1.bf16.msra.mxu0 0
          %924 = vmatprep.subr.bf16.mxu0 0
          %925 = vmatpush1.bf16.msra.mxu0 0
          %926 = vmatprep.subr.bf16.mxu0 0
          %927 = vmatpush1.bf16.msra.mxu0 0
          %928 = vmatprep.mubr.bf16.mxu0 0
          %929 = vmatmul.mubr.bf16.gmra.mrb[0].mxu0 %v854
          %v930 = vpop.f32.mrb[0].mxu0
          %v931 = vadd.f32 %v891, %v930
          %v932 = vpop.f32.mrb[0].mxu0
          %v933 = vpop.f32.mrb[0].mxu0
          %v934 = vpop.f32.mrb[0].mxu0
          %935 = vdwg.mxu0
          %vm936 = vcmp.gt.f32.partialorder %v931, 0.0
          %v937 = vmul.f32 %v931, 0.2
          %v938 = vsel %vm936, %v931, %v937
          %v939 = vsub.f32 0.0, %v938
          %v940 = vmul.f32 %v939, 1.442695
          %v941 = vpow.pop %v940
          %v942 = vmax.f32 %v941, -5.0
          %v943 = vmin.f32 %v942, 5.0
          %944 = vst [vmem:[%s400] sm:$0xff] %v943
          %v945 = vld [vmem:[#allocation2] sm:$0xf]
          %v946 = vld [vmem:[#allocation2 + $0x4] sm:$0xf]
          %v947 = vld [vmem:[#allocation2 + $0x8] sm:$0xf]
          %v948 = vld [vmem:[#allocation2 + $0xc] sm:$0xf]
          %v949 = vld [vmem:[#allocation2 + $0x10] sm:$0xf]
          %v950 = vld [vmem:[#allocation2 + $0x14] sm:$0xf]
          %v951 = vld [vmem:[#allocation2 + $0x18] sm:$0xf]
          %v952 = vld [vmem:[#allocation2 + $0x1c] sm:$0xf]
          %v953 = vld [vmem:[#allocation2 + $0x20] sm:$0xf]
          %v963 = vunpack.c.l.b16 %v945
          %v964 = vunpack.c.l.b16 %v946
          %v965 = vunpack.c.l.b16 %v947
          %v966 = vunpack.c.l.b16 %v948
          %v967 = vunpack.c.l.b16 %v949
          %v968 = vunpack.c.l.b16 %v950
          %v969 = vunpack.c.l.b16 %v951
          %v970 = vunpack.c.l.b16 %v952
          %v971 = vunpack.c.l.b16 %v953
          %v972 = vpack.c.b16 %v964, %v963
          %v973 = vpack.c.b16 %v966, %v965
          %v974 = vpack.c.b16 %v968, %v967
          %v975 = vpack.c.b16 %v970, %v969
          %v976 = vpack.c.b16 %v971, %v971
          %982 = vmatprep.subr.bf16.mxu0 0
          %983 = vmatpush1.bf16.msra.mxu0 %v541
          %984 = vmatprep.subr.bf16.mxu0 0
          %985 = vmatpush1.bf16.msra.mxu0 %v542
          %986 = vmatprep.subr.bf16.mxu0 0
          %987 = vmatpush1.bf16.msra.mxu0 %v543
          %988 = vmatprep.subr.bf16.mxu0 0
          %989 = vmatpush1.bf16.msra.mxu0 %v544
          %990 = vmatprep.subr.bf16.mxu0 0
          %991 = vmatpush1.bf16.msra.mxu0 %v545
          %992 = vmatprep.subr.bf16.mxu0 0
          %993 = vmatpush1.bf16.msra.mxu0 %v546
          %994 = vmatprep.subr.bf16.mxu0 0
          %995 = vmatpush1.bf16.msra.mxu0 %v547
          %996 = vmatprep.subr.bf16.mxu0 0
          %997 = vmatpush1.bf16.msra.mxu0 %v548
          %998 = vmatprep.subr.bf16.mxu0 0
          %999 = vmatpush1.bf16.msra.mxu0 0
          %1000 = vmatprep.subr.bf16.mxu0 0
          %1001 = vmatpush1.bf16.msra.mxu0 0
          %1002 = vmatprep.subr.bf16.mxu0 0
          %1003 = vmatpush1.bf16.msra.mxu0 0
          %1004 = vmatprep.subr.bf16.mxu0 0
          %1005 = vmatpush1.bf16.msra.mxu0 0
          %1006 = vmatprep.subr.bf16.mxu0 0
          %1007 = vmatpush1.bf16.msra.mxu0 0
          %1008 = vmatprep.subr.bf16.mxu0 0
          %1009 = vmatpush1.bf16.msra.mxu0 0
          %1010 = vmatprep.subr.bf16.mxu0 0
          %1011 = vmatpush1.bf16.msra.mxu0 0
          %1012 = vmatprep.subr.bf16.mxu0 0
          %1013 = vmatpush1.bf16.msra.mxu0 0
          %1014 = vmatprep.mubr.bf16.mxu0 0
          %1015 = vmatmul.mubr.bf16.gmra.mrb[0].mxu0 %v972
          %v1016 = vpop.f32.mrb[0].mxu0
          %v1017 = vadd.f32 0.0, %v1016
          %v1018 = vpop.f32.mrb[0].mxu0
          %v1019 = vpop.f32.mrb[0].mxu0
          %v1020 = vadd.f32 0.0, %v1019
          %v1021 = vpop.f32.mrb[0].mxu0
          %1022 = vmatprep.mubr.bf16.mxu0 0
          %1023 = vmatmul.mubr.bf16.gmra.mrb[0].mxu0 %v973
          %v1024 = vpop.f32.mrb[0].mxu0
          %v1025 = vadd.f32 0.0, %v1024
          %v1026 = vpop.f32.mrb[0].mxu0
          %v1027 = vpop.f32.mrb[0].mxu0
          %v1028 = vadd.f32 0.0, %v1027
          %v1029 = vpop.f32.mrb[0].mxu0
          %1030 = vmatprep.mubr.bf16.mxu0 0
          %1031 = vmatmul.mubr.bf16.gmra.mrb[0].mxu0 %v974
          %v1032 = vpop.f32.mrb[0].mxu0
          %v1033 = vadd.f32 0.0, %v1032
          %v1034 = vpop.f32.mrb[0].mxu0
          %v1035 = vpop.f32.mrb[0].mxu0
          %v1036 = vadd.f32 0.0, %v1035
          %v1037 = vpop.f32.mrb[0].mxu0
          %1038 = vmatprep.mubr.bf16.mxu0 0
          %1039 = vmatmul.mubr.bf16.gmra.mrb[0].mxu0 %v975
          %v1040 = vpop.f32.mrb[0].mxu0
          %v1041 = vadd.f32 0.0, %v1040
          %v1042 = vpop.f32.mrb[0].mxu0
          %v1043 = vpop.f32.mrb[0].mxu0
          %v1044 = vadd.f32 0.0, %v1043
          %v1045 = vpop.f32.mrb[0].mxu0
          %1046 = vmatprep.mubr.bf16.mxu0 0
          %1047 = vmatmul.mubr.bf16.gmra.mrb[0].mxu0 %v976
          %v1048 = vpop.f32.mrb[0].mxu0
          %v1049 = vadd.f32 0.0, %v1048
          %v1050 = vpop.f32.mrb[0].mxu0
          %v1051 = vpop.f32.mrb[0].mxu0
          %v1052 = vpop.f32.mrb[0].mxu0
          %1053 = vdwg.mxu0
          %v1054 = vld [vmem:[%s5] sm:$0xf]
          %v1055 = vld [vmem:[%s5 + $0x4] sm:$0xf]
          %v1056 = vld [vmem:[%s5 + $0x8] sm:$0xf]
          %v1057 = vld [vmem:[%s5 + $0xc] sm:$0xf]
          %v1058 = vld [vmem:[%s5 + $0x10] sm:$0xf]
          %v1059 = vld [vmem:[%s5 + $0x14] sm:$0xf]
          %v1060 = vld [vmem:[%s5 + $0x18] sm:$0xf]
          %v1061 = vld [vmem:[%s5 + $0x1c] sm:$0xf]
          %v1062 = vld [vmem:[%s5 + $0x20] sm:$0xf]
          %v1063 = vpack.c.bf16 %v943, %v943
          %v1073 = vunpack.c.l.b16 %v1054
          %v1074 = vunpack.c.l.b16 %v1055
          %v1075 = vunpack.c.l.b16 %v1056
          %v1076 = vunpack.c.l.b16 %v1057
          %v1077 = vunpack.c.l.b16 %v1058
          %v1078 = vunpack.c.l.b16 %v1059
          %v1079 = vunpack.c.l.b16 %v1060
          %v1080 = vunpack.c.l.b16 %v1061
          %v1081 = vunpack.c.l.b16 %v1062
          %v1082 = vpack.c.b16 %v1074, %v1073
          %v1083 = vpack.c.b16 %v1076, %v1075
          %v1084 = vpack.c.b16 %v1078, %v1077
          %v1085 = vpack.c.b16 %v1080, %v1079
          %v1086 = vpack.c.b16 %v1081, %v1081
          %vm1087 = vcmask 64512
          %v1089 = vsel %vm1087, %v1082, 0
          %v1092 = vsel %vm1087, %v1083, 0
          %v1095 = vsel %vm1087, %v1084, 0
          %v1098 = vsel %vm1087, %v1085, 0
          %v1101 = vsel %vm1087, %v1086, 0
          %vm1103 = vcmask 1043456
          %v1105 = vsel %vm1103, %v1063, 0
          %1107 = vmatprep.subr.bf16.mxu0 0
          %1108 = vmatpush1.bf16.msra.mxu0 %v1105
          %1109 = vmatprep.subr.bf16.mxu0 0
          %1110 = vmatpush1.bf16.msra.mxu0 0
          %1111 = vmatprep.subr.bf16.mxu0 0
          %1112 = vmatpush1.bf16.msra.mxu0 0
          %1113 = vmatprep.subr.bf16.mxu0 0
          %1114 = vmatpush1.bf16.msra.mxu0 0
          %1115 = vmatprep.subr.bf16.mxu0 0
          %1116 = vmatpush1.bf16.msra.mxu0 0
          %1117 = vmatprep.subr.bf16.mxu0 0
          %1118 = vmatpush1.bf16.msra.mxu0 0
          %1119 = vmatprep.subr.bf16.mxu0 0
          %1120 = vmatpush1.bf16.msra.mxu0 0
          %1121 = vmatprep.subr.bf16.mxu0 0
          %1122 = vmatpush1.bf16.msra.mxu0 0
          %1123 = vmatprep.subr.bf16.mxu0 0
          %1124 = vmatpush1.bf16.msra.mxu0 0
          %1125 = vmatprep.subr.bf16.mxu0 0
          %1126 = vmatpush1.bf16.msra.mxu0 0
          %1127 = vmatprep.subr.bf16.mxu0 0
          %1128 = vmatpush1.bf16.msra.mxu0 0
          %1129 = vmatprep.subr.bf16.mxu0 0
          %1130 = vmatpush1.bf16.msra.mxu0 0
          %1131 = vmatprep.subr.bf16.mxu0 0
          %1132 = vmatpush1.bf16.msra.mxu0 0
          %1133 = vmatprep.subr.bf16.mxu0 0
          %1134 = vmatpush1.bf16.msra.mxu0 0
          %1135 = vmatprep.subr.bf16.mxu0 0
          %1136 = vmatpush1.bf16.msra.mxu0 0
          %1137 = vmatprep.subr.bf16.mxu0 0
          %1138 = vmatpush1.bf16.msra.mxu0 0
          %1139 = vmatprep.mubr.bf16.mxu0 0
          %1140 = vmatmul.mubr.bf16.gmra.mrb[0].mxu0 %v1089
          %v1141 = vpop.f32.mrb[0].mxu0
          %v1142 = vadd.f32 0.0, %v1141
          %v1143 = vpop.f32.mrb[0].mxu0
          %v1144 = vpop.f32.mrb[0].mxu0
          %v1145 = vadd.f32 0.0, %v1144
          %v1146 = vpop.f32.mrb[0].mxu0
          %1147 = vmatprep.mubr.bf16.mxu0 0
          %1148 = vmatmul.mubr.bf16.gmra.mrb[0].mxu0 %v1092
          %v1149 = vpop.f32.mrb[0].mxu0
          %v1150 = vadd.f32 0.0, %v1149
          %v1151 = vpop.f32.mrb[0].mxu0
          %v1152 = vpop.f32.mrb[0].mxu0
          %v1153 = vadd.f32 0.0, %v1152
          %v1154 = vpop.f32.mrb[0].mxu0
          %1155 = vmatprep.mubr.bf16.mxu0 0
          %1156 = vmatmul.mubr.bf16.gmra.mrb[0].mxu0 %v1095
          %v1157 = vpop.f32.mrb[0].mxu0
          %v1158 = vadd.f32 0.0, %v1157
          %v1159 = vpop.f32.mrb[0].mxu0
          %v1160 = vpop.f32.mrb[0].mxu0
          %v1161 = vadd.f32 0.0, %v1160
          %v1162 = vpop.f32.mrb[0].mxu0
          %1163 = vmatprep.mubr.bf16.mxu0 0
          %1164 = vmatmul.mubr.bf16.gmra.mrb[0].mxu0 %v1098
          %v1165 = vpop.f32.mrb[0].mxu0
          %v1166 = vadd.f32 0.0, %v1165
          %v1167 = vpop.f32.mrb[0].mxu0
          %v1168 = vpop.f32.mrb[0].mxu0
          %v1169 = vadd.f32 0.0, %v1168
          %v1170 = vpop.f32.mrb[0].mxu0
          %1171 = vmatprep.mubr.bf16.mxu0 0
          %1172 = vmatmul.mubr.bf16.gmra.mrb[0].mxu0 %v1101
          %v1173 = vpop.f32.mrb[0].mxu0
          %v1174 = vadd.f32 0.0, %v1173
          %v1175 = vpop.f32.mrb[0].mxu0
          %v1176 = vpop.f32.mrb[0].mxu0
          %v1177 = vpop.f32.mrb[0].mxu0
          %1178 = vdwg.mxu0
          %v1179 = vld [vmem:[#allocation4] sm:$0xff]
          %v1180 = vld [vmem:[#allocation4 + $0x8] sm:$0xff]
          %v1181 = vld [vmem:[#allocation4 + $0x10] sm:$0xff]
          %v1182 = vld [vmem:[#allocation4 + $0x18] sm:$0xff]
          %v1183 = vld [vmem:[#allocation4 + $0x20] sm:$0xff]
          %v1184 = vld [vmem:[#allocation4 + $0x28] sm:$0xff]
          %v1185 = vld [vmem:[#allocation4 + $0x30] sm:$0xff]
          %v1186 = vld [vmem:[#allocation4 + $0x38] sm:$0xff]
          %v1187 = vld [vmem:[#allocation4 + $0x40] sm:$0xff]
          %v1188 = vmul.f32 %v1142, %v1017
          %v1189 = vmul.f32 %v1145, %v1020
          %v1190 = vmul.f32 %v1150, %v1025
          %v1191 = vmul.f32 %v1153, %v1028
          %v1192 = vmul.f32 %v1158, %v1033
          %v1193 = vmul.f32 %v1161, %v1036
          %v1194 = vmul.f32 %v1166, %v1041
          %v1195 = vmul.f32 %v1169, %v1044
          %v1196 = vmul.f32 %v1174, %v1049
          %v1197 = vpack.c.bf16 %v1189, %v1188
          %v1198 = vpack.c.bf16 %v1191, %v1190
          %v1199 = vpack.c.bf16 %v1193, %v1192
          %v1200 = vpack.c.bf16 %v1195, %v1194
          %v1201 = vpack.c.bf16 %v1196, %v1196
          %1202 = vmatprep.subr.bf16.mxu0 0
          %1203 = vmatpush1.bf16.xpose.msra.mxu0 %v480
          %1204 = vmatprep.subr.bf16.mxu0 0
          %1205 = vmatpush1.bf16.xpose.msra.mxu0 %v481
          %1206 = vmatprep.subr.bf16.mxu0 0
          %1207 = vmatpush1.bf16.xpose.msra.mxu0 %v482
          %1208 = vmatprep.subr.bf16.mxu0 0
          %1209 = vmatpush1.bf16.xpose.msra.mxu0 %v483
          %1210 = vmatprep.subr.bf16.mxu0 0
          %1211 = vmatpush1.bf16.xpose.msra.mxu0 %v484
          %1212 = vmatprep.subr.bf16.mxu0 0
          %1213 = vmatpush1.bf16.xpose.msra.mxu0 %v485
          %1214 = vmatprep.subr.bf16.mxu0 0
          %1215 = vmatpush1.bf16.xpose.msra.mxu0 %v486
          %1216 = vmatprep.subr.bf16.mxu0 0
          %1217 = vmatpush1.bf16.xpose.msra.mxu0 %v487
          %1218 = vmatprep.subr.bf16.mxu0 0
          %1219 = vmatpush1.bf16.xpose.msra.mxu0 0
          %1220 = vmatprep.subr.bf16.mxu0 0
          %1221 = vmatpush1.bf16.xpose.msra.mxu0 0
          %1222 = vmatprep.subr.bf16.mxu0 0
          %1223 = vmatpush1.bf16.xpose.msra.mxu0 0
          %1224 = vmatprep.subr.bf16.mxu0 0
          %1225 = vmatpush1.bf16.xpose.msra.mxu0 0
          %1226 = vmatprep.subr.bf16.mxu0 0
          %1227 = vmatpush1.bf16.xpose.msra.mxu0 0
          %1228 = vmatprep.subr.bf16.mxu0 0
          %1229 = vmatpush1.bf16.xpose.msra.mxu0 0
          %1230 = vmatprep.subr.bf16.mxu0 0
          %1231 = vmatpush1.bf16.xpose.msra.mxu0 0
          %1232 = vmatprep.subr.bf16.mxu0 0
          %1233 = vmatpush1.bf16.xpose.msra.mxu0 0
          %1234 = vmatprep.mubr.bf16.mxu0 0
          %1235 = vmatmul.mubr.bf16.gmra.mrb[0].mxu0 %v1197
          %v1236 = vpop.f32.mrb[0].mxu0
          %v1237 = vadd.f32 0.0, %v1236
          %v1238 = vpop.f32.mrb[0].mxu0
          %v1239 = vpop.f32.mrb[0].mxu0
          %v1240 = vadd.f32 0.0, %v1239
          %v1241 = vpop.f32.mrb[0].mxu0
          %1242 = vmatprep.mubr.bf16.mxu0 0
          %1243 = vmatmul.mubr.bf16.gmra.mrb[0].mxu0 %v1198
          %v1244 = vpop.f32.mrb[0].mxu0
          %v1245 = vadd.f32 0.0, %v1244
          %v1246 = vpop.f32.mrb[0].mxu0
          %v1247 = vpop.f32.mrb[0].mxu0
          %v1248 = vadd.f32 0.0, %v1247
          %v1249 = vpop.f32.mrb[0].mxu0
          %1250 = vmatprep.mubr.bf16.mxu0 0
          %1251 = vmatmul.mubr.bf16.gmra.mrb[0].mxu0 %v1199
          %v1252 = vpop.f32.mrb[0].mxu0
          %v1253 = vadd.f32 0.0, %v1252
          %v1254 = vpop.f32.mrb[0].mxu0
          %v1255 = vpop.f32.mrb[0].mxu0
          %v1256 = vadd.f32 0.0, %v1255
          %v1257 = vpop.f32.mrb[0].mxu0
          %1258 = vmatprep.mubr.bf16.mxu0 0
          %1259 = vmatmul.mubr.bf16.gmra.mrb[0].mxu0 %v1200
          %v1260 = vpop.f32.mrb[0].mxu0
          %v1261 = vadd.f32 0.0, %v1260
          %v1262 = vpop.f32.mrb[0].mxu0
          %v1263 = vpop.f32.mrb[0].mxu0
          %v1264 = vadd.f32 0.0, %v1263
          %v1265 = vpop.f32.mrb[0].mxu0
          %1266 = vmatprep.mubr.bf16.mxu0 0
          %1267 = vmatmul.mubr.bf16.gmra.mrb[0].mxu0 %v1201
          %v1268 = vpop.f32.mrb[0].mxu0
          %v1269 = vadd.f32 0.0, %v1268
          %v1270 = vpop.f32.mrb[0].mxu0
          %v1271 = vpop.f32.mrb[0].mxu0
          %v1272 = vpop.f32.mrb[0].mxu0
          %1273 = vdwg.mxu0
          %v1274 = vadd.f32 %v1179, %v1237
          %v1275 = vadd.f32 %v1180, %v1240
          %v1276 = vadd.f32 %v1181, %v1245
          %v1277 = vadd.f32 %v1182, %v1248
          %v1278 = vadd.f32 %v1183, %v1253
          %v1279 = vadd.f32 %v1184, %v1256
          %v1280 = vadd.f32 %v1185, %v1261
          %v1281 = vadd.f32 %v1186, %v1264
          %v1282 = vadd.f32 %v1187, %v1269
          %1283 = vst [vmem:[#allocation4] sm:$0xff] %v1274
          %1284 = vst [vmem:[#allocation4 + $0x8] sm:$0xff] %v1275
          %1285 = vst [vmem:[#allocation4 + $0x10] sm:$0xff] %v1276
          %1286 = vst [vmem:[#allocation4 + $0x18] sm:$0xff] %v1277
          %1287 = vst [vmem:[#allocation4 + $0x20] sm:$0xff] %v1278
          %1288 = vst [vmem:[#allocation4 + $0x28] sm:$0xff] %v1279
          %1289 = vst [vmem:[#allocation4 + $0x30] sm:$0xff] %v1280
          %1290 = vst [vmem:[#allocation4 + $0x38] sm:$0xff] %v1281
          %1291 = vst [vmem:[#allocation4 + $0x40] sm:$0xff] %v1282
        $region64: #{dscom_forward.1} parent=59 // pred_fallthru
          _
        %p1292 = scmp.eq.s32.totalorder %s30, 1
        // Predicated region
        $region69: #{dscom_forward.1} parent=59 // pred_check
          %p1293 = pneg %p1292
        $region70: #{dscom_forward.1} parent=59 // pred_check_branch
          %1295 = sbr.rel (%p1293) target = $region72
        $region71: #{dscom_forward.1} parent=59 // pred_region
          %p1296 = scmp.eq.s32.totalorder %s31, 0
          // Predicated region
          $region73: #{dscom_forward.1} parent=71 // pred_check
            %p1297 = pneg %p1296
          $region74: #{dscom_forward.1} parent=71 // pred_check_branch
            %1299 = sbr.rel (%p1297) target = $region76
          $region75: #{dscom_forward.1} parent=71 // pred_region
            %v1300 = vld [vmem:[#allocation4] sm:$0xff]
            %v1301 = vld [vmem:[#allocation4 + $0x8] sm:$0xff]
            %v1302 = vld [vmem:[#allocation4 + $0x10] sm:$0xff]
            %v1303 = vld [vmem:[#allocation4 + $0x18] sm:$0xff]
            %v1304 = vld [vmem:[#allocation4 + $0x20] sm:$0xff]
            %v1305 = vld [vmem:[#allocation4 + $0x28] sm:$0xff]
            %v1306 = vld [vmem:[#allocation4 + $0x30] sm:$0xff]
            %v1307 = vld [vmem:[#allocation4 + $0x38] sm:$0xff]
            %v1308 = vld [vmem:[#allocation4 + $0x40] sm:$0xff]
            %vm1309 = vcmp.gt.f32.partialorder %v1308, 0.0
            %v1310 = vsel %vm1309, %v1308, 1e-08
            %v1311 = vrcp.pop %v1310
            %v1312 = vld [vmem:[%s5] sm:$0xf]
            %v1313 = vld [vmem:[%s5 + $0x4] sm:$0xf]
            %v1314 = vld [vmem:[%s5 + $0x8] sm:$0xf]
            %v1315 = vld [vmem:[%s5 + $0xc] sm:$0xf]
            %v1316 = vld [vmem:[%s5 + $0x10] sm:$0xf]
            %v1317 = vld [vmem:[%s5 + $0x14] sm:$0xf]
            %v1318 = vld [vmem:[%s5 + $0x18] sm:$0xf]
            %v1319 = vld [vmem:[%s5 + $0x1c] sm:$0xf]
            %v1320 = vpack.c.bf16 %v1311, %v1311
            %v1329 = vunpack.c.l.b16 %v1312
            %v1330 = vunpack.c.l.b16 %v1313
            %v1331 = vunpack.c.l.b16 %v1314
            %v1332 = vunpack.c.l.b16 %v1315
            %v1333 = vunpack.c.l.b16 %v1316
            %v1334 = vunpack.c.l.b16 %v1317
            %v1335 = vunpack.c.l.b16 %v1318
            %v1336 = vunpack.c.l.b16 %v1319
            %v1337 = vpack.c.b16 %v1330, %v1329
            %v1338 = vpack.c.b16 %v1332, %v1331
            %v1339 = vpack.c.b16 %v1334, %v1333
            %v1340 = vpack.c.b16 %v1336, %v1335
            %vm1341 = vcmask 64512
            %v1343 = vsel %vm1341, %v1337, 0
            %v1346 = vsel %vm1341, %v1338, 0
            %v1349 = vsel %vm1341, %v1339, 0
            %v1352 = vsel %vm1341, %v1340, 0
            %vm1354 = vcmask 1043456
            %v1356 = vsel %vm1354, %v1320, 0
            %1358 = vmatprep.subr.bf16.mxu0 0
            %1359 = vmatpush1.bf16.msra.mxu0 %v1356
            %1360 = vmatprep.subr.bf16.mxu0 0
            %1361 = vmatpush1.bf16.msra.mxu0 0
            %1362 = vmatprep.subr.bf16.mxu0 0
            %1363 = vmatpush1.bf16.msra.mxu0 0
            %1364 = vmatprep.subr.bf16.mxu0 0
            %1365 = vmatpush1.bf16.msra.mxu0 0
            %1366 = vmatprep.subr.bf16.mxu0 0
            %1367 = vmatpush1.bf16.msra.mxu0 0
            %1368 = vmatprep.subr.bf16.mxu0 0
            %1369 = vmatpush1.bf16.msra.mxu0 0
            %1370 = vmatprep.subr.bf16.mxu0 0
            %1371 = vmatpush1.bf16.msra.mxu0 0
            %1372 = vmatprep.subr.bf16.mxu0 0
            %1373 = vmatpush1.bf16.msra.mxu0 0
            %1374 = vmatprep.subr.bf16.mxu0 0
            %1375 = vmatpush1.bf16.msra.mxu0 0
            %1376 = vmatprep.subr.bf16.mxu0 0
            %1377 = vmatpush1.bf16.msra.mxu0 0
            %1378 = vmatprep.subr.bf16.mxu0 0
            %1379 = vmatpush1.bf16.msra.mxu0 0
            %1380 = vmatprep.subr.bf16.mxu0 0
            %1381 = vmatpush1.bf16.msra.mxu0 0
            %1382 = vmatprep.subr.bf16.mxu0 0
            %1383 = vmatpush1.bf16.msra.mxu0 0
            %1384 = vmatprep.subr.bf16.mxu0 0
            %1385 = vmatpush1.bf16.msra.mxu0 0
            %1386 = vmatprep.subr.bf16.mxu0 0
            %1387 = vmatpush1.bf16.msra.mxu0 0
            %1388 = vmatprep.subr.bf16.mxu0 0
            %1389 = vmatpush1.bf16.msra.mxu0 0
            %1390 = vmatprep.mubr.bf16.mxu0 0
            %1391 = vmatmul.mubr.bf16.gmra.mrb[0].mxu0 %v1343
            %v1392 = vpop.f32.mrb[0].mxu0
            %v1393 = vadd.f32 0.0, %v1392
            %v1394 = vpop.f32.mrb[0].mxu0
            %v1395 = vpop.f32.mrb[0].mxu0
            %v1396 = vadd.f32 0.0, %v1395
            %v1397 = vpop.f32.mrb[0].mxu0
            %1398 = vmatprep.mubr.bf16.mxu0 0
            %1399 = vmatmul.mubr.bf16.gmra.mrb[0].mxu0 %v1346
            %v1400 = vpop.f32.mrb[0].mxu0
            %v1401 = vadd.f32 0.0, %v1400
            %v1402 = vpop.f32.mrb[0].mxu0
            %v1403 = vpop.f32.mrb[0].mxu0
            %v1404 = vadd.f32 0.0, %v1403
            %v1405 = vpop.f32.mrb[0].mxu0
            %1406 = vmatprep.mubr.bf16.mxu0 0
            %1407 = vmatmul.mubr.bf16.gmra.mrb[0].mxu0 %v1349
            %v1408 = vpop.f32.mrb[0].mxu0
            %v1409 = vadd.f32 0.0, %v1408
            %v1410 = vpop.f32.mrb[0].mxu0
            %v1411 = vpop.f32.mrb[0].mxu0
            %v1412 = vadd.f32 0.0, %v1411
            %v1413 = vpop.f32.mrb[0].mxu0
            %1414 = vmatprep.mubr.bf16.mxu0 0
            %1415 = vmatmul.mubr.bf16.gmra.mrb[0].mxu0 %v1352
            %v1416 = vpop.f32.mrb[0].mxu0
            %v1417 = vadd.f32 0.0, %v1416
            %v1418 = vpop.f32.mrb[0].mxu0
            %v1419 = vpop.f32.mrb[0].mxu0
            %v1420 = vadd.f32 0.0, %v1419
            %v1421 = vpop.f32.mrb[0].mxu0
            %1422 = vdwg.mxu0
            %v1423 = vmul.f32 %v1300, %v1393
            %v1424 = vmul.f32 %v1301, %v1396
            %v1425 = vmul.f32 %v1302, %v1401
            %v1426 = vmul.f32 %v1303, %v1404
            %v1427 = vmul.f32 %v1304, %v1409
            %v1428 = vmul.f32 %v1305, %v1412
            %v1429 = vmul.f32 %v1306, %v1417
            %v1430 = vmul.f32 %v1307, %v1420
            %vm1431 = vcmp.gt.f32.partialorder %v1423, 0.0
            %vm1432 = vcmp.gt.f32.partialorder %v1424, 0.0
            %vm1433 = vcmp.gt.f32.partialorder %v1425, 0.0
            %vm1434 = vcmp.gt.f32.partialorder %v1426, 0.0
            %vm1435 = vcmp.gt.f32.partialorder %v1427, 0.0
            %vm1436 = vcmp.gt.f32.partialorder %v1428, 0.0
            %vm1437 = vcmp.gt.f32.partialorder %v1429, 0.0
            %vm1438 = vcmp.gt.f32.partialorder %v1430, 0.0
            %v1439 = vmul.f32 %v1423, 1.442695
            %v1440 = vpow.pop %v1439
            %v1441 = vmul.f32 %v1424, 1.442695
            %v1442 = vpow.pop %v1441
            %v1443 = vmul.f32 %v1425, 1.442695
            %v1444 = vpow.pop %v1443
            %v1445 = vmul.f32 %v1426, 1.442695
            %v1446 = vpow.pop %v1445
            %v1447 = vmul.f32 %v1427, 1.442695
            %v1448 = vpow.pop %v1447
            %v1449 = vmul.f32 %v1428, 1.442695
            %v1450 = vpow.pop %v1449
            %v1451 = vmul.f32 %v1429, 1.442695
            %v1452 = vpow.pop %v1451
            %v1453 = vmul.f32 %v1430, 1.442695
            %v1454 = vpow.pop %v1453
            %v1455 = vsub.f32 %v1440, 1.0
            %v1456 = vsub.f32 %v1442, 1.0
            %v1457 = vsub.f32 %v1444, 1.0
            %v1458 = vsub.f32 %v1446, 1.0
            %v1459 = vsub.f32 %v1448, 1.0
            %v1460 = vsub.f32 %v1450, 1.0
            %v1461 = vsub.f32 %v1452, 1.0
            %v1462 = vsub.f32 %v1454, 1.0
            %v1463 = vsel %vm1431, %v1423, %v1455
            %v1464 = vsel %vm1432, %v1424, %v1456
            %v1465 = vsel %vm1433, %v1425, %v1457
            %v1466 = vsel %vm1434, %v1426, %v1458
            %v1467 = vsel %vm1435, %v1427, %v1459
            %v1468 = vsel %vm1436, %v1428, %v1460
            %v1469 = vsel %vm1437, %v1429, %v1461
            %v1470 = vsel %vm1438, %v1430, %v1462
            %vm1471 = vcmp.gt.f32.partialorder %v1463, 0.0
            %vm1472 = vcmp.gt.f32.partialorder %v1464, 0.0
            %vm1473 = vcmp.gt.f32.partialorder %v1465, 0.0
            %vm1474 = vcmp.gt.f32.partialorder %v1466, 0.0
            %vm1475 = vcmp.gt.f32.partialorder %v1467, 0.0
            %vm1476 = vcmp.gt.f32.partialorder %v1468, 0.0
            %vm1477 = vcmp.gt.f32.partialorder %v1469, 0.0
            %vm1478 = vcmp.gt.f32.partialorder %v1470, 0.0
            %v1479 = vmul.f32 %v1463, 1.442695
            %v1480 = vpow.pop %v1479
            %v1481 = vmul.f32 %v1464, 1.442695
            %v1482 = vpow.pop %v1481
            %v1483 = vmul.f32 %v1465, 1.442695
            %v1484 = vpow.pop %v1483
            %v1485 = vmul.f32 %v1466, 1.442695
            %v1486 = vpow.pop %v1485
            %v1487 = vmul.f32 %v1467, 1.442695
            %v1488 = vpow.pop %v1487
            %v1489 = vmul.f32 %v1468, 1.442695
            %v1490 = vpow.pop %v1489
            %v1491 = vmul.f32 %v1469, 1.442695
            %v1492 = vpow.pop %v1491
            %v1493 = vmul.f32 %v1470, 1.442695
            %v1494 = vpow.pop %v1493
            %v1495 = vsub.f32 %v1480, 1.0
            %v1496 = vsub.f32 %v1482, 1.0
            %v1497 = vsub.f32 %v1484, 1.0
            %v1498 = vsub.f32 %v1486, 1.0
            %v1499 = vsub.f32 %v1488, 1.0
            %v1500 = vsub.f32 %v1490, 1.0
            %v1501 = vsub.f32 %v1492, 1.0
            %v1502 = vsub.f32 %v1494, 1.0
            %v1503 = vsel %vm1471, %v1463, %v1495
            %v1504 = vsel %vm1472, %v1464, %v1496
            %v1505 = vsel %vm1473, %v1465, %v1497
            %v1506 = vsel %vm1474, %v1466, %v1498
            %v1507 = vsel %vm1475, %v1467, %v1499
            %v1508 = vsel %vm1476, %v1468, %v1500
            %v1509 = vsel %vm1477, %v1469, %v1501
            %v1510 = vsel %vm1478, %v1470, %v1502
            %v1511 = vpack.c.bf16 %v1504, %v1503
            %v1512 = vpack.c.bf16 %v1506, %v1505
            %v1513 = vpack.c.bf16 %v1508, %v1507
            %v1514 = vpack.c.bf16 %v1510, %v1509
            %v1515 = vld [vmem:[%s6] sm:$0xf]
            %vm1516 = vcmask 523264
            %v1518 = vsel %vm1516, %v1515, 0
            %1520 = vmatprep.subr.bf16.mxu0 0
            %1521 = vmatpush1.bf16.msra.mxu0 %v1511
            %1522 = vmatprep.subr.bf16.mxu0 0
            %1523 = vmatpush1.bf16.msra.mxu0 %v1512
            %1524 = vmatprep.subr.bf16.mxu0 0
            %1525 = vmatpush1.bf16.msra.mxu0 %v1513
            %1526 = vmatprep.subr.bf16.mxu0 0
            %1527 = vmatpush1.bf16.msra.mxu0 %v1514
            %1528 = vmatprep.subr.bf16.mxu0 0
            %1529 = vmatpush1.bf16.msra.mxu0 0
            %1530 = vmatprep.subr.bf16.mxu0 0
            %1531 = vmatpush1.bf16.msra.mxu0 0
            %1532 = vmatprep.subr.bf16.mxu0 0
            %1533 = vmatpush1.bf16.msra.mxu0 0
            %1534 = vmatprep.subr.bf16.mxu0 0
            %1535 = vmatpush1.bf16.msra.mxu0 0
            %1536 = vmatprep.subr.bf16.mxu0 0
            %1537 = vmatpush1.bf16.msra.mxu0 0
            %1538 = vmatprep.subr.bf16.mxu0 0
            %1539 = vmatpush1.bf16.msra.mxu0 0
            %1540 = vmatprep.subr.bf16.mxu0 0
            %1541 = vmatpush1.bf16.msra.mxu0 0
            %1542 = vmatprep.subr.bf16.mxu0 0
            %1543 = vmatpush1.bf16.msra.mxu0 0
            %1544 = vmatprep.subr.bf16.mxu0 0
            %1545 = vmatpush1.bf16.msra.mxu0 0
            %1546 = vmatprep.subr.bf16.mxu0 0
            %1547 = vmatpush1.bf16.msra.mxu0 0
            %1548 = vmatprep.subr.bf16.mxu0 0
            %1549 = vmatpush1.bf16.msra.mxu0 0
            %1550 = vmatprep.subr.bf16.mxu0 0
            %1551 = vmatpush1.bf16.msra.mxu0 0
            %1552 = vmatprep.mubr.bf16.mxu0 0
            %1553 = vmatmul.mubr.bf16.gmra.mrb[0].mxu0 %v1518
            %v1554 = vpop.f32.mrb[0].mxu0
            %v1555 = vadd.f32 0.0, %v1554
            %v1556 = vpop.f32.mrb[0].mxu0
            %v1557 = vpop.f32.mrb[0].mxu0
            %v1558 = vpop.f32.mrb[0].mxu0
            %1559 = vdwg.mxu0
            %vm1560 = vcmp.eq.s32.totalorder %v411, 4
            %v1561 = vsel %vm1560, 1.0, %v1555
            %v1562 = vpack.c.bf16 %v1561, %v1561
            %1563 = vst [vmem:[#allocation5] sm:$0xf] %v1562
            %v1564 = vld [vmem:[%s7] sm:$0xf]
            %v1565 = vpack.c.bf16 %v1555, %v1555
            %v1567 = vsel %vm1341, %v1564, 0
            %v1570 = vsel %vm1354, %v1565, 0
            %1572 = vmatprep.subr.bf16.mxu0 0
            %1573 = vmatpush1.bf16.msra.mxu0 %v1570
            %1574 = vmatprep.subr.bf16.mxu0 0
            %1575 = vmatpush1.bf16.msra.mxu0 0
            %1576 = vmatprep.subr.bf16.mxu0 0
            %1577 = vmatpush1.bf16.msra.mxu0 0
            %1578 = vmatprep.subr.bf16.mxu0 0
            %1579 = vmatpush1.bf16.msra.mxu0 0
            %1580 = vmatprep.subr.bf16.mxu0 0
            %1581 = vmatpush1.bf16.msra.mxu0 0
            %1582 = vmatprep.subr.bf16.mxu0 0
            %1583 = vmatpush1.bf16.msra.mxu0 0
            %1584 = vmatprep.subr.bf16.mxu0 0
            %1585 = vmatpush1.bf16.msra.mxu0 0
            %1586 = vmatprep.subr.bf16.mxu0 0
            %1587 = vmatpush1.bf16.msra.mxu0 0
            %1588 = vmatprep.subr.bf16.mxu0 0
            %1589 = vmatpush1.bf16.msra.mxu0 0
            %1590 = vmatprep.subr.bf16.mxu0 0
            %1591 = vmatpush1.bf16.msra.mxu0 0
            %1592 = vmatprep.subr.bf16.mxu0 0
            %1593 = vmatpush1.bf16.msra.mxu0 0
            %1594 = vmatprep.subr.bf16.mxu0 0
            %1595 = vmatpush1.bf16.msra.mxu0 0
            %1596 = vmatprep.subr.bf16.mxu0 0
            %1597 = vmatpush1.bf16.msra.mxu0 0
            %1598 = vmatprep.subr.bf16.mxu0 0
            %1599 = vmatpush1.bf16.msra.mxu0 0
            %1600 = vmatprep.subr.bf16.mxu0 0
            %1601 = vmatpush1.bf16.msra.mxu0 0
            %1602 = vmatprep.subr.bf16.mxu0 0
            %1603 = vmatpush1.bf16.msra.mxu0 0
            %1604 = vmatprep.mubr.bf16.mxu0 0
            %1605 = vmatmul.mubr.bf16.gmra.mrb[0].mxu0 %v1567
            %v1606 = vpop.f32.mrb[0].mxu0
            %v1607 = vadd.f32 0.0, %v1606
            %v1608 = vpop.f32.mrb[0].mxu0
            %v1609 = vpop.f32.mrb[0].mxu0
            %v1610 = vpop.f32.mrb[0].mxu0
            %1611 = vdwg.mxu0
            %1612 = vst [vmem:[#allocation6] sm:$0xff] %v1607
            %1613 = vst [vmem:[#allocation7] sm:$0xff] 0.0
          $region76: #{dscom_forward.1} parent=71 // pred_fallthru
            _
          %v1614 = vld [vmem:[#allocation6] sm:$0xff]
          %v1615 = vpack.c.bf16 %v1614, %v1614
          %v1617 = vshrl.u32 %v1615, 16
          %1620 = vmatprep.subr.bf16.mxu0 0
          %1621 = vmatpush1.bf16.msra.mxu0 %v541
          %1622 = vmatprep.subr.bf16.mxu0 0
          %1623 = vmatpush1.bf16.msra.mxu0 %v542
          %1624 = vmatprep.subr.bf16.mxu0 0
          %1625 = vmatpush1.bf16.msra.mxu0 %v543
          %1626 = vmatprep.subr.bf16.mxu0 0
          %1627 = vmatpush1.bf16.msra.mxu0 %v544
          %1628 = vmatprep.subr.bf16.mxu0 0
          %1629 = vmatpush1.bf16.msra.mxu0 %v545
          %1630 = vmatprep.subr.bf16.mxu0 0
          %1631 = vmatpush1.bf16.msra.mxu0 %v546
          %1632 = vmatprep.subr.bf16.mxu0 0
          %1633 = vmatpush1.bf16.msra.mxu0 %v547
          %1634 = vmatprep.subr.bf16.mxu0 0
          %1635 = vmatpush1.bf16.msra.mxu0 %v548
          %1636 = vmatprep.subr.bf16.mxu0 0
          %1637 = vmatpush1.bf16.msra.mxu0 0
          %1638 = vmatprep.subr.bf16.mxu0 0
          %1639 = vmatpush1.bf16.msra.mxu0 0
          %1640 = vmatprep.subr.bf16.mxu0 0
          %1641 = vmatpush1.bf16.msra.mxu0 0
          %1642 = vmatprep.subr.bf16.mxu0 0
          %1643 = vmatpush1.bf16.msra.mxu0 0
          %1644 = vmatprep.subr.bf16.mxu0 0
          %1645 = vmatpush1.bf16.msra.mxu0 0
          %1646 = vmatprep.subr.bf16.mxu0 0
          %1647 = vmatpush1.bf16.msra.mxu0 0
          %1648 = vmatprep.subr.bf16.mxu0 0
          %1649 = vmatpush1.bf16.msra.mxu0 0
          %1650 = vmatprep.subr.bf16.mxu0 0
          %1651 = vmatpush1.bf16.msra.mxu0 0
          %1652 = vmatprep.mubr.bf16.mxu0 0
          %1653 = vmatmul.mubr.bf16.gmra.mrb[0].mxu0 %v1617
          %v1654 = vpop.f32.mrb[0].mxu0
          %v1655 = vadd.f32 0.0, %v1654
          %v1656 = vpop.f32.mrb[0].mxu0
          %v1657 = vpop.f32.mrb[0].mxu0
          %v1658 = vpop.f32.mrb[0].mxu0
          %1659 = vdwg.mxu0
          %1660 = vmatprep.subr.bf16.mxu0 0
          %1661 = vmatpush1.bf16.msra.mxu0 %v480
          %1662 = vmatprep.subr.bf16.mxu0 0
          %1663 = vmatpush1.bf16.msra.mxu0 %v481
          %1664 = vmatprep.subr.bf16.mxu0 0
          %1665 = vmatpush1.bf16.msra.mxu0 %v482
          %1666 = vmatprep.subr.bf16.mxu0 0
          %1667 = vmatpush1.bf16.msra.mxu0 %v483
          %1668 = vmatprep.subr.bf16.mxu0 0
          %1669 = vmatpush1.bf16.msra.mxu0 %v484
          %1670 = vmatprep.subr.bf16.mxu0 0
          %1671 = vmatpush1.bf16.msra.mxu0 %v485
          %1672 = vmatprep.subr.bf16.mxu0 0
          %1673 = vmatpush1.bf16.msra.mxu0 %v486
          %1674 = vmatprep.subr.bf16.mxu0 0
          %1675 = vmatpush1.bf16.msra.mxu0 %v487
          %1676 = vmatprep.subr.bf16.mxu0 0
          %1677 = vmatpush1.bf16.msra.mxu0 0
          %1678 = vmatprep.subr.bf16.mxu0 0
          %1679 = vmatpush1.bf16.msra.mxu0 0
          %1680 = vmatprep.subr.bf16.mxu0 0
          %1681 = vmatpush1.bf16.msra.mxu0 0
          %1682 = vmatprep.subr.bf16.mxu0 0
          %1683 = vmatpush1.bf16.msra.mxu0 0
          %1684 = vmatprep.subr.bf16.mxu0 0
          %1685 = vmatpush1.bf16.msra.mxu0 0
          %1686 = vmatprep.subr.bf16.mxu0 0
          %1687 = vmatpush1.bf16.msra.mxu0 0
          %1688 = vmatprep.subr.bf16.mxu0 0
          %1689 = vmatpush1.bf16.msra.mxu0 0
          %1690 = vmatprep.subr.bf16.mxu0 0
          %1691 = vmatpush1.bf16.msra.mxu0 0
          %1692 = vmatprep.mubr.bf16.mxu0 0
          %1693 = vmatmul.mubr.bf16.gmra.mrb[0].mxu0 %v1615
          %v1694 = vpop.f32.mrb[0].mxu0
          %v1695 = vadd.f32 %v1655, %v1694
          %v1696 = vpop.f32.mrb[0].mxu0
          %v1697 = vpop.f32.mrb[0].mxu0
          %v1698 = vpop.f32.mrb[0].mxu0
          %1699 = vdwg.mxu0
          %vm1700 = vcmp.gt.f32.partialorder %v1695, 0.0
          %v1701 = vmul.f32 %v1695, 0.2
          %v1702 = vsel %vm1700, %v1695, %v1701
          %v1703 = vsub.f32 0.0, %v1702
          %v1704 = vmul.f32 %v1703, 1.442695
          %v1705 = vpow.pop %v1704
          %v1706 = vmax.f32 %v1705, -5.0
          %v1707 = vmin.f32 %v1706, 5.0
          %v1708 = vld [vmem:[#allocation5] sm:$0xf]
          %1709 = vmatprep.subr.bf16.mxu0 0
          %1710 = vmatpush1.bf16.msra.mxu0 %v541
          %1711 = vmatprep.subr.bf16.mxu0 0
          %1712 = vmatpush1.bf16.msra.mxu0 %v542
          %1713 = vmatprep.subr.bf16.mxu0 0
          %1714 = vmatpush1.bf16.msra.mxu0 %v543
          %1715 = vmatprep.subr.bf16.mxu0 0
          %1716 = vmatpush1.bf16.msra.mxu0 %v544
          %1717 = vmatprep.subr.bf16.mxu0 0
          %1718 = vmatpush1.bf16.msra.mxu0 %v545
          %1719 = vmatprep.subr.bf16.mxu0 0
          %1720 = vmatpush1.bf16.msra.mxu0 %v546
          %1721 = vmatprep.subr.bf16.mxu0 0
          %1722 = vmatpush1.bf16.msra.mxu0 %v547
          %1723 = vmatprep.subr.bf16.mxu0 0
          %1724 = vmatpush1.bf16.msra.mxu0 %v548
          %1725 = vmatprep.subr.bf16.mxu0 0
          %1726 = vmatpush1.bf16.msra.mxu0 0
          %1727 = vmatprep.subr.bf16.mxu0 0
          %1728 = vmatpush1.bf16.msra.mxu0 0
          %1729 = vmatprep.subr.bf16.mxu0 0
          %1730 = vmatpush1.bf16.msra.mxu0 0
          %1731 = vmatprep.subr.bf16.mxu0 0
          %1732 = vmatpush1.bf16.msra.mxu0 0
          %1733 = vmatprep.subr.bf16.mxu0 0
          %1734 = vmatpush1.bf16.msra.mxu0 0
          %1735 = vmatprep.subr.bf16.mxu0 0
          %1736 = vmatpush1.bf16.msra.mxu0 0
          %1737 = vmatprep.subr.bf16.mxu0 0
          %1738 = vmatpush1.bf16.msra.mxu0 0
          %1739 = vmatprep.subr.bf16.mxu0 0
          %1740 = vmatpush1.bf16.msra.mxu0 0
          %1741 = vmatprep.mubr.bf16.mxu0 0
          %1742 = vmatmul.mubr.bf16.gmra.mrb[0].mxu0 %v1708
          %v1743 = vpop.f32.mrb[0].mxu0
          %v1744 = vadd.f32 0.0, %v1743
          %v1745 = vpop.f32.mrb[0].mxu0
          %v1746 = vpop.f32.mrb[0].mxu0
          %v1747 = vpop.f32.mrb[0].mxu0
          %1748 = vdwg.mxu0
          %v1749 = vld [vmem:[#allocation7] sm:$0xff]
          %v1750 = vlaneseq
          %v1751 = vshrl.u32 %v1750, 7
          %v1752 = vsub.s32 0, %v1751
          %v1753 = vrot.slane %v1707, %v1752
          %v1754 = vmul.f32 %v1753, %v1744
          %v1755 = vpack.c.bf16 %v1754, %v1754
          %1756 = vmatprep.subr.bf16.mxu0 0
          %1757 = vmatpush1.bf16.xpose.msra.mxu0 %v480
          %1758 = vmatprep.subr.bf16.mxu0 0
          %1759 = vmatpush1.bf16.xpose.msra.mxu0 %v481
          %1760 = vmatprep.subr.bf16.mxu0 0
          %1761 = vmatpush1.bf16.xpose.msra.mxu0 %v482
          %1762 = vmatprep.subr.bf16.mxu0 0
          %1763 = vmatpush1.bf16.xpose.msra.mxu0 %v483
          %1764 = vmatprep.subr.bf16.mxu0 0
          %1765 = vmatpush1.bf16.xpose.msra.mxu0 %v484
          %1766 = vmatprep.subr.bf16.mxu0 0
          %1767 = vmatpush1.bf16.xpose.msra.mxu0 %v485
          %1768 = vmatprep.subr.bf16.mxu0 0
          %1769 = vmatpush1.bf16.xpose.msra.mxu0 %v486
          %1770 = vmatprep.subr.bf16.mxu0 0
          %1771 = vmatpush1.bf16.xpose.msra.mxu0 %v487
          %1772 = vmatprep.subr.bf16.mxu0 0
          %1773 = vmatpush1.bf16.xpose.msra.mxu0 0
          %1774 = vmatprep.subr.bf16.mxu0 0
          %1775 = vmatpush1.bf16.xpose.msra.mxu0 0
          %1776 = vmatprep.subr.bf16.mxu0 0
          %1777 = vmatpush1.bf16.xpose.msra.mxu0 0
          %1778 = vmatprep.subr.bf16.mxu0 0
          %1779 = vmatpush1.bf16.xpose.msra.mxu0 0
          %1780 = vmatprep.subr.bf16.mxu0 0
          %1781 = vmatpush1.bf16.xpose.msra.mxu0 0
          %1782 = vmatprep.subr.bf16.mxu0 0
          %1783 = vmatpush1.bf16.xpose.msra.mxu0 0
          %1784 = vmatprep.subr.bf16.mxu0 0
          %1785 = vmatpush1.bf16.xpose.msra.mxu0 0
          %1786 = vmatprep.subr.bf16.mxu0 0
          %1787 = vmatpush1.bf16.xpose.msra.mxu0 0
          %1788 = vmatprep.mubr.bf16.mxu0 0
          %1789 = vmatmul.mubr.bf16.gmra.mrb[0].mxu0 %v1755
          %v1790 = vpop.f32.mrb[0].mxu0
          %v1791 = vadd.f32 0.0, %v1790
          %v1792 = vpop.f32.mrb[0].mxu0
          %v1793 = vpop.f32.mrb[0].mxu0
          %v1794 = vpop.f32.mrb[0].mxu0
          %1795 = vdwg.mxu0
          %v1796 = vadd.f32 %v1749, %v1791
          %1797 = vst [vmem:[#allocation7] sm:$0xff] %v1796
          // Predicated region
          $region77: #{dscom_forward.1} parent=71 // pred_check
            %p1798 = pneg %p1296
          $region78: #{dscom_forward.1} parent=71 // pred_check_branch
            %1800 = sbr.rel (%p1798) target = $region80
          $region79: #{dscom_forward.1} parent=71 // pred_region
            %v1801 = vld [vmem:[#allocation7 + $0x4] sm:$0x1]
            %vm1802 = vcmp.gt.f32.partialorder %v1801, 0.0
            %v1803 = vsel %vm1802, %v1801, 1e-08
            %v1804 = vrcp.pop %v1803
            %v1805 = vld [vmem:[#allocation7] sm:$0xff]
            %v1806 = vlaneseq
            %v1807 = vshrl.u32 %v1806, 7
            %v1808 = vsub.s32 0, %v1807
            %v1809 = vrot.slane %v1804, %v1808
            %v1810 = vmul.f32 %v1805, %v1809
            %vm1811 = vcmp.gt.f32.partialorder %v1810, 0.0
            %v1812 = vmul.f32 %v1810, 1.442695
            %v1813 = vpow.pop %v1812
            %v1814 = vsub.f32 %v1813, 1.0
            %v1815 = vsel %vm1811, %v1810, %v1814
            %vm1816 = vcmp.gt.f32.partialorder %v1815, 0.0
            %v1817 = vmul.f32 %v1815, 1.442695
            %v1818 = vpow.pop %v1817
            %v1819 = vsub.f32 %v1818, 1.0
            %v1820 = vsel %vm1816, %v1815, %v1819
            %v1821 = vpack.c.bf16 %v1820, %v1820
            %v1822 = vld [vmem:[%s8] sm:$0xf]
            %v1823 = vld [vmem:[%s9] sm:$0xff]
            %1825 = vset.pattern.permute.xlu0 0
            %1826 = vperm.xlu0 %1825, %v1823
            %v1827 = vpop.permute.xlu0 %1826
            %vm1829 = vcmask 64512
            %v1831 = vsel %vm1829, %v1822, 0
            %vm1833 = vcmask 1043456
            %v1835 = vsel %vm1833, %v1821, 0
            %1837 = vmatprep.subr.bf16.mxu0 0
            %1838 = vmatpush1.bf16.msra.mxu0 %v1835
            %1839 = vmatprep.subr.bf16.mxu0 0
            %1840 = vmatpush1.bf16.msra.mxu0 0
            %1841 = vmatprep.subr.bf16.mxu0 0
            %1842 = vmatpush1.bf16.msra.mxu0 0
            %1843 = vmatprep.subr.bf16.mxu0 0
            %1844 = vmatpush1.bf16.msra.mxu0 0
            %1845 = vmatprep.subr.bf16.mxu0 0
            %1846 = vmatpush1.bf16.msra.mxu0 0
            %1847 = vmatprep.subr.bf16.mxu0 0
            %1848 = vmatpush1.bf16.msra.mxu0 0
            %1849 = vmatprep.subr.bf16.mxu0 0
            %1850 = vmatpush1.bf16.msra.mxu0 0
            %1851 = vmatprep.subr.bf16.mxu0 0
            %1852 = vmatpush1.bf16.msra.mxu0 0
            %1853 = vmatprep.subr.bf16.mxu0 0
            %1854 = vmatpush1.bf16.msra.mxu0 0
            %1855 = vmatprep.subr.bf16.mxu0 0
            %1856 = vmatpush1.bf16.msra.mxu0 0
            %1857 = vmatprep.subr.bf16.mxu0 0
            %1858 = vmatpush1.bf16.msra.mxu0 0
            %1859 = vmatprep.subr.bf16.mxu0 0
            %1860 = vmatpush1.bf16.msra.mxu0 0
            %1861 = vmatprep.subr.bf16.mxu0 0
            %1862 = vmatpush1.bf16.msra.mxu0 0
            %1863 = vmatprep.subr.bf16.mxu0 0
            %1864 = vmatpush1.bf16.msra.mxu0 0
            %1865 = vmatprep.subr.bf16.mxu0 0
            %1866 = vmatpush1.bf16.msra.mxu0 0
            %1867 = vmatprep.subr.bf16.mxu0 0
            %1868 = vmatpush1.bf16.msra.mxu0 0
            %1869 = vmatprep.mubr.bf16.mxu0 0
            %1870 = vmatmul.mubr.bf16.gmra.mrb[0].mxu0 %v1831
            %v1871 = vpop.f32.mrb[0].mxu0
            %v1872 = vadd.f32 %v1827, %v1871
            %v1873 = vpop.f32.mrb[0].mxu0
            %v1874 = vpop.f32.mrb[0].mxu0
            %v1875 = vpop.f32.mrb[0].mxu0
            %1876 = vdwg.mxu0
            %vm1877 = vcmp.gt.f32.partialorder %v1872, 0.0
            %v1878 = vmul.f32 %v1872, 1.442695
            %v1879 = vpow.pop %v1878
            %v1880 = vsub.f32 %v1879, 1.0
            %v1881 = vsel %vm1877, %v1872, %v1880
            %1882 = vst [vmem:[%s10] sm:$0xff] %v1881
          $region80: #{dscom_forward.1} parent=71 // pred_fallthru
            _
        $region72: #{dscom_forward.1} parent=59 // pred_fallthru
          _
        %s1883 = sand.u32 %s291, 1
        %s1884 = scalar_lea.sflag [#allocation9], %s1883
        %s1885 = sand.u32 %s291, 1
        %s1886 = smul.addr %s1885, 8
        %s1887 = scalar_lea.vmem [#allocation8], %s1886
        // Predicated region
        $region81: #{dscom_forward.1} parent=59 // pred_check
          %p1888 = pneg %p271
        $region82: #{dscom_forward.1} parent=59 // pred_check_branch
          %1890 = sbr.rel (%p1888) target = $region84
        $region83: #{dscom_forward.1} parent=59 // pred_region
          _
        $region84: #{dscom_forward.1} parent=59 // pred_fallthru
          _
        // Predicated region
        $region85: #{dscom_forward.1} parent=59 // pred_check
          %p1891 = pneg %p301
        $region86: #{dscom_forward.1} parent=59 // pred_check_branch
          %1893 = sbr.rel (%p1891) target = $region88
        $region87: #{dscom_forward.1} parent=59 // pred_region
          %s1894 = ssub.s32 1, %s30
          %s1895 = smul.u32 %s1894, %s31
          %s1897 = ssub.s32 128, 128
          %1898 = vsyncadd %s1884, %s1897
          %s1899 = smul.addr %s1895, 128
          %s1900 = scalar_lea.hbm %s11, %s1899
          %s1902 = sshll.u32 %s1887, 4
          %s1903 = int_to_ptr.vmem [resolvable:$true] %s1902
          %1905 = dma.vmem_to_hbm [thread:$0]  %s1903, 128, %s1900, %s1884
        $region88: #{dscom_forward.1} parent=59 // pred_fallthru
          _
        // Predicated region
        $region89: #{dscom_forward.1} parent=59 // pred_check
          %p1906 = pneg %p271
        $region90: #{dscom_forward.1} parent=59 // pred_check_branch
          %1908 = sbr.rel (%p1906) target = $region92
        $region91: #{dscom_forward.1} parent=59 // pred_region
          _
        $region92: #{dscom_forward.1} parent=59 // pred_fallthru
          _
      $region60: #{dscom_forward.1} parent=5 // pred_fallthru
        _
      %p1909 = scmp.le.s32.totalorder 2, %s21
      // Predicated region
      $region93: #{dscom_forward.1} parent=5 // pred_check
        %p1910 = pneg %p1909
      $region94: #{dscom_forward.1} parent=5 // pred_check_branch
        %1912 = sbr.rel (%p1910) target = $region96
      $region95: #{dscom_forward.1} parent=5 // pred_region
        %s1913 = ssub.s32 %s21, 2
        // Predicated region
        $region97: #{dscom_forward.1} parent=95 // pred_check
          %p1914 = pneg %p307
        $region98: #{dscom_forward.1} parent=95 // pred_check_branch
          %1916 = sbr.rel (%p1914) target = $region100
        $region99: #{dscom_forward.1} parent=95 // pred_region
          %s1917 = sand.u32 %s292, 1
          %s1918 = scalar_lea.sflag [#allocation9], %s1917
          %s1919 = sand.u32 %s292, 1
          %s1920 = smul.addr %s1919, 8
          %s1921 = scalar_lea.vmem [#allocation8], %s1920
          %1922 = dma.done %s1918, 128
        $region100: #{dscom_forward.1} parent=95 // pred_fallthru
          _
      $region96: #{dscom_forward.1} parent=5 // pred_fallthru
        _
    $region6: #{dscom_forward.1} parent=1 // loop_footer
      %s25 = sadd.s32 1, %s21
    $region7: #{dscom_forward.1} parent=1 // loop_footer_branch
      %20 = sbr.rel target = $region3
    $region8: #{dscom_forward.1} parent=1 // loop_exit
      _
    %1923 = vsyncpa [#allocation9], 1
    %s1924 = scalar_lea.sflag [#allocation9], 1
    %1925 = vsyncpa %s1924, 1

</llo_original>
